<compile_context>
chip_gen: v7x
topology: tpu7x:2x2x1
jax: 0.10.0
libtpu: 0.0.40
codegen_flags: <defaults>
</compile_context>

<pallas_src>
import functools

import jax
import jax.numpy as jnp
from jax.experimental import pallas as pl
from jax.experimental.pallas import tpu as pltpu

IN_F = 784      # flattened MNIST pixels (kept un-padded; full-extent last dim)
H1 = 512
H2 = 128
OUT_F = 10
OUT_PAD = 128   # lane-dense padded output width


def mlp_kernel(x_ref, w1_ref, b1_ref, w2_ref, b2_ref, w3_ref, b3_ref, o_ref):
    # x arrives as f32 straight from HBM; bf16 cast happens here on the VPU,
    # hidden under the MXU-dominated bundle (saves a wrapper pad/cast pass).
    x = x_ref[...].astype(jnp.bfloat16)                          # (TB, 784)
    # Layer 1: (TB,784)bf16 @ (784,512)bf16 -> f32 acc; bias + ReLU in f32.
    h1 = jnp.dot(x, w1_ref[...], preferred_element_type=jnp.float32)
    h1 = jnp.maximum(h1 + b1_ref[...], 0.0)
    # Layer 2: (TB,512) @ (512,128) -> f32 acc; bias + ReLU in f32.
    h2 = jnp.dot(h1.astype(jnp.bfloat16), w2_ref[...],
                 preferred_element_type=jnp.float32)
    h2 = jnp.maximum(h2 + b2_ref[...], 0.0)
    # Layer 3: (TB,128) @ (128,128) -> f32; lane-dense (128-wide) padded store.
    out = jnp.dot(h2.astype(jnp.bfloat16), w3_ref[...],
                  preferred_element_type=jnp.float32)
    o_ref[...] = out + b3_ref[...]


def init_params(key):
    """Deterministic init matching nn.Linear shapes (kaiming-uniform-ish), f32."""
    k1, k2, k3, k4, k5, k6 = jax.random.split(key, 6)

    def lin(kw, kb, fan_in, fan_out):
        bound = 1.0 / jnp.sqrt(fan_in)
        # PyTorch stores W as (out, in); we keep transposed (in, out) so the
        # kernel does x @ W + b.
        w = jax.random.uniform(kw, (fan_in, fan_out), jnp.float32, -bound, bound)
        b = jax.random.uniform(kb, (1, fan_out), jnp.float32, -bound, bound)
        return w, b

    w1, b1 = lin(k1, k2, IN_F, H1)
    w2, b2 = lin(k3, k4, H1, H2)
    w3, b3 = lin(k5, k6, H2, OUT_F)
    return {"w1": w1, "b1": b1, "w2": w2, "b2": b2, "w3": w3, "b3": b3}


def prepare_params(params):
    """One-time prep: weights -> bf16, output lanes padded to 128. Keep device-resident."""
    w1 = params["w1"].astype(jnp.bfloat16)                         # (784, 512)
    w2 = params["w2"].astype(jnp.bfloat16)                         # (512, 128)
    w3 = jnp.pad(params["w3"], ((0, 0), (0, OUT_PAD - OUT_F))).astype(jnp.bfloat16)
    b1 = params["b1"].astype(jnp.float32)
    b2 = params["b2"].astype(jnp.float32)
    b3 = jnp.pad(params["b3"], ((0, 0), (0, OUT_PAD - OUT_F))).astype(jnp.float32)
    return {"w1": w1, "b1": b1, "w2": w2, "b2": b2, "w3": w3, "b3": b3}


@functools.partial(jax.jit, static_argnames=("tb",))
def mnist_net_forward(x, prepared, tb=1024):
    """x: (B, 784) float32. prepared: output of prepare_params. Returns (B, 10) f32."""
    B = x.shape[0]
    bp8 = ((B + 7) // 8) * 8

    # Batch tile: multiple of 8 sublanes, clamped to the (8-padded) batch.
    tb = max(8, (int(tb) // 8) * 8)
    tb = min(tb, bp8)
    # Keep >= 2 grid steps whenever the batch allows so the "parallel" batch
    # axis can split across both TensorCores on v7x (no-op on v5e/v6e).
    if bp8 >= 16 and tb > bp8 // 2:
        tb = max(8, ((bp8 // 2) // 8) * 8)
    # Bound batch-padding waste: padded rows are pure extra MXU work + DMA bytes.
    while tb > 8 and (pl.cdiv(bp8, tb) * tb - bp8) * 10 > bp8:
        tb -= 8
    bp = pl.cdiv(bp8, tb) * tb
    grid_steps = bp // tb

    # Pad batch rows only if needed (no feature-dim pad, no wrapper-side cast).
    xp = x if bp == B else jnp.pad(x, ((0, bp - B), (0, 0)))

    w1, b1, w2, b2, w3, b3 = (
        prepared[k] for k in ("w1", "b1", "w2", "b2", "w3", "b3"))

    # x is pipelined over the batch; small tiles get a deeper pipeline so the
    # short per-step matmul can still hide the x DMA.
    x_spec_kwargs = {}
    if tb <= 128 and grid_steps >= 3:
        x_spec_kwargs["pipeline_mode"] = pl.Buffered(3)
    x_spec = pl.BlockSpec((tb, IN_F), lambda i: (i, 0), **x_spec_kwargs)

    const = lambda i: (0, 0)  # weights/biases: same block every step -> VMEM-resident

    cp_kwargs = dict(dimension_semantics=("parallel",))
    if tb >= 2048:
        # Only very large tiles need an explicit VMEM budget; default scoped
        # limit is plenty below that on every generation (incl. v7x's 64 MiB).
        need = 2 * tb * IN_F * 4 + 2 * tb * OUT_PAD * 4 + (12 << 20)
        cp_kwargs["vmem_limit_bytes"] = min(int(need * 1.25), 56 * 1024 * 1024)

    out = pl.pallas_call(
        mlp_kernel,
        out_shape=jax.ShapeDtypeStruct((bp, OUT_PAD), jnp.float32),
        grid=(grid_steps,),
        in_specs=[
            x_spec,                                    # x: tiled over batch
            pl.BlockSpec((IN_F, H1), const),           # w1 (784, 512) bf16
            pl.BlockSpec((1, H1), const),              # b1
            pl.BlockSpec((H1, H2), const),             # w2 (512, 128) bf16
            pl.BlockSpec((1, H2), const),              # b2
            pl.BlockSpec((H2, OUT_PAD), const),        # w3 (128, 128) bf16
            pl.BlockSpec((1, OUT_PAD), const),         # b3
        ],
        out_specs=pl.BlockSpec((tb, OUT_PAD), lambda i: (i, 0)),
        compiler_params=pltpu.CompilerParams(**cp_kwargs),
    )(xp, w1, b1, w2, b2, w3, b3)

    # Drop batch padding and padded output lanes (cols 10..127 are exactly zero).
    return out[:B, :OUT_F]


if __name__ == "__main__":
    key_in = jax.random.PRNGKey(0)
    key_p = jax.random.PRNGKey(42)

    B = 64  # small batch for the self-test (use B >= 4096, tb >= 512 for perf runs)
    x = jax.random.normal(key_in, (B, IN_F), dtype=jnp.float32)
    params = init_params(key_p)
    prepared = prepare_params(params)

    # Default (large) tile: clamps to a 2-step batch grid for this small batch.
    out = jax.block_until_ready(mnist_net_forward(x, prepared))
    assert out.shape == (B, OUT_F)

    # Small tile: exercises an 8-step batch grid + deeper x pipelining.
    out_small = jax.block_until_ready(mnist_net_forward(x, prepared, tb=8))
    assert out_small.shape == (B, OUT_F)

    # Reference 1: same bf16 weight/activation casts as the kernel (tight check).
    xb = x.astype(jnp.bfloat16)
    h1 = jnp.maximum(
        jnp.dot(xb, prepared["w1"], preferred_element_type=jnp.float32)
        + prepared["b1"], 0.0)
    h2 = jnp.maximum(
        jnp.dot(h1.astype(jnp.bfloat16), prepared["w2"],
                preferred_element_type=jnp.float32) + prepared["b2"], 0.0)
    ref_bf16 = (jnp.dot(h2.astype(jnp.bfloat16), prepared["w3"],
                        preferred_element_type=jnp.float32)
                + prepared["b3"])[:, :OUT_F]
    assert jnp.allclose(out, ref_bf16, atol=1e-2, rtol=1e-2), \
        float(jnp.max(jnp.abs(out - ref_bf16)))
    assert jnp.allclose(out_small, ref_bf16, atol=1e-2, rtol=1e-2), \
        float(jnp.max(jnp.abs(out_small - ref_bf16)))

    # Reference 2: full f32 math (same as PyTorch forward), loose tol for bf16.
    h1f = jnp.maximum(x @ params["w1"] + params["b1"], 0.0)
    h2f = jnp.maximum(h1f @ params["w2"] + params["b2"], 0.0)
    ref_f32 = h2f @ params["w3"] + params["b3"]
    assert jnp.allclose(out, ref_f32, atol=5e-2, rtol=5e-2), \
        float(jnp.max(jnp.abs(out - ref_f32)))

    print("KERNEL_OK")
</pallas_src>

<mosaic_0001>
module attributes {stable_mosaic.version = 11 : i64} {
  func.func @mlp_kernel(%arg0: i32, %arg1: memref<32x784xf32, #tpu.memory_space<vmem>>, %arg2: memref<784x512xbf16, #tpu.memory_space<vmem>>, %arg3: memref<1x512xf32, #tpu.memory_space<vmem>>, %arg4: memref<512x128xbf16, #tpu.memory_space<vmem>>, %arg5: memref<1x128xf32, #tpu.memory_space<vmem>>, %arg6: memref<128x128xbf16, #tpu.memory_space<vmem>>, %arg7: memref<1x128xf32, #tpu.memory_space<vmem>>, %arg8: memref<32x128xf32, #tpu.memory_space<vmem>>) attributes {dimension_semantics = [#tpu.dimension_semantics<parallel>], iteration_bounds = array<i64: 2>, scalar_prefetch = 0 : i64, scratch_operands = 0 : i64, tpu.core_type = #tpu.core_type<tc>, window_params = [{transform_indices = @transform_0, window_bounds = array<i64: 32, 784>}, {pipeline_mode = #tpu.pipeline_mode<synchronous>, transform_indices = @transform_1, window_bounds = array<i64: 784, 512>}, {pipeline_mode = #tpu.pipeline_mode<synchronous>, transform_indices = @transform_2, window_bounds = array<i64: 1, 512>}, {pipeline_mode = #tpu.pipeline_mode<synchronous>, transform_indices = @transform_3, window_bounds = array<i64: 512, 128>}, {pipeline_mode = #tpu.pipeline_mode<synchronous>, transform_indices = @transform_4, window_bounds = array<i64: 1, 128>}, {pipeline_mode = #tpu.pipeline_mode<synchronous>, transform_indices = @transform_5, window_bounds = array<i64: 128, 128>}, {pipeline_mode = #tpu.pipeline_mode<synchronous>, transform_indices = @transform_6, window_bounds = array<i64: 1, 128>}, {transform_indices = @transform_7, window_bounds = array<i64: 32, 128>}]} {
    %c0 = arith.constant 0 : index
    %c0_0 = arith.constant 0 : index
    %0 = vector.load %arg1[%c0, %c0_0] : memref<32x784xf32, #tpu.memory_space<vmem>>, vector<32x784xf32>
    %1 = arith.truncf %0 : vector<32x784xf32> to vector<32x784xbf16>
    %c0_1 = arith.constant 0 : index
    %c0_2 = arith.constant 0 : index
    %2 = vector.load %arg2[%c0_1, %c0_2] : memref<784x512xbf16, #tpu.memory_space<vmem>>, vector<784x512xbf16>
    %cst = arith.constant dense<0.000000e+00> : vector<32x512xf32>
    %3 = tpu.matmul %1, %2, %cst {dimension_numbers = #tpu.dot_dimension_numbers<[1], [0], [0], [1], [0, 0, 1, 1], [], []>} : vector<32x784xbf16>, vector<784x512xbf16>, vector<32x512xf32> -> vector<32x512xf32>
    %c0_3 = arith.constant 0 : index
    %c0_4 = arith.constant 0 : index
    %4 = vector.load %arg3[%c0_3, %c0_4] : memref<1x512xf32, #tpu.memory_space<vmem>>, vector<1x512xf32>
    %5 = vector.broadcast %4 : vector<1x512xf32> to vector<32x512xf32>
    %6 = arith.addf %3, %5 : vector<32x512xf32>
    %cst_5 = arith.constant 0.000000e+00 : f32
    %7 = vector.broadcast %cst_5 : f32 to vector<32x512xf32>
    %8 = arith.maximumf %6, %7 : vector<32x512xf32>
    %9 = arith.truncf %8 : vector<32x512xf32> to vector<32x512xbf16>
    %c0_6 = arith.constant 0 : index
    %c0_7 = arith.constant 0 : index
    %10 = vector.load %arg4[%c0_6, %c0_7] : memref<512x128xbf16, #tpu.memory_space<vmem>>, vector<512x128xbf16>
    %cst_8 = arith.constant dense<0.000000e+00> : vector<32x128xf32>
    %11 = tpu.matmul %9, %10, %cst_8 {dimension_numbers = #tpu.dot_dimension_numbers<[1], [0], [0], [1], [0, 0, 1, 1], [], []>} : vector<32x512xbf16>, vector<512x128xbf16>, vector<32x128xf32> -> vector<32x128xf32>
    %c0_9 = arith.constant 0 : index
    %c0_10 = arith.constant 0 : index
    %12 = vector.load %arg5[%c0_9, %c0_10] : memref<1x128xf32, #tpu.memory_space<vmem>>, vector<1x128xf32>
    %13 = vector.broadcast %12 : vector<1x128xf32> to vector<32x128xf32>
    %14 = arith.addf %11, %13 : vector<32x128xf32>
    %cst_11 = arith.constant 0.000000e+00 : f32
    %15 = vector.broadcast %cst_11 : f32 to vector<32x128xf32>
    %16 = arith.maximumf %14, %15 : vector<32x128xf32>
    %17 = arith.truncf %16 : vector<32x128xf32> to vector<32x128xbf16>
    %c0_12 = arith.constant 0 : index
    %c0_13 = arith.constant 0 : index
    %18 = vector.load %arg6[%c0_12, %c0_13] : memref<128x128xbf16, #tpu.memory_space<vmem>>, vector<128x128xbf16>
    %cst_14 = arith.constant dense<0.000000e+00> : vector<32x128xf32>
    %19 = tpu.matmul %17, %18, %cst_14 {dimension_numbers = #tpu.dot_dimension_numbers<[1], [0], [0], [1], [0, 0, 1, 1], [], []>} : vector<32x128xbf16>, vector<128x128xbf16>, vector<32x128xf32> -> vector<32x128xf32>
    %c0_15 = arith.constant 0 : index
    %c0_16 = arith.constant 0 : index
    %20 = vector.load %arg7[%c0_15, %c0_16] : memref<1x128xf32, #tpu.memory_space<vmem>>, vector<1x128xf32>
    %21 = vector.broadcast %20 : vector<1x128xf32> to vector<32x128xf32>
    %22 = arith.addf %19, %21 : vector<32x128xf32>
    %c0_17 = arith.constant 0 : index
    %c0_18 = arith.constant 0 : index
    %23 = vector.load %arg8[%c0_17, %c0_18] : memref<32x128xf32, #tpu.memory_space<vmem>>, vector<32x128xf32>
    tpu.vector_store %arg8[%c0_17, %c0_18], %22 {strides = array<i32>} : memref<32x128xf32, #tpu.memory_space<vmem>>, vector<32x128xf32>,
    return
  }
  func.func @transform_0(%arg0: i32) -> (i32, i32) {
    %c0_i32 = arith.constant 0 : i32
    %c0_i32_0 = arith.constant 0 : i32
    return %arg0, %c0_i32 : i32, i32
  }
  func.func @transform_1(%arg0: i32) -> (i32, i32) {
    %c0_i32 = arith.constant 0 : i32
    %c0_i32_0 = arith.constant 0 : i32
    %c0_i32_1 = arith.constant 0 : i32
    return %c0_i32, %c0_i32_0 : i32, i32
  }
  func.func @transform_2(%arg0: i32) -> (i32, i32) {
    %c0_i32 = arith.constant 0 : i32
    %c0_i32_0 = arith.constant 0 : i32
    %c0_i32_1 = arith.constant 0 : i32
    return %c0_i32, %c0_i32_0 : i32, i32
  }
  func.func @transform_3(%arg0: i32) -> (i32, i32) {
    %c0_i32 = arith.constant 0 : i32
    %c0_i32_0 = arith.constant 0 : i32
    %c0_i32_1 = arith.constant 0 : i32
    return %c0_i32, %c0_i32_0 : i32, i32
  }
  func.func @transform_4(%arg0: i32) -> (i32, i32) {
    %c0_i32 = arith.constant 0 : i32
    %c0_i32_0 = arith.constant 0 : i32
    %c0_i32_1 = arith.constant 0 : i32
    return %c0_i32, %c0_i32_0 : i32, i32
  }
  func.func @transform_5(%arg0: i32) -> (i32, i32) {
    %c0_i32 = arith.constant 0 : i32
    %c0_i32_0 = arith.constant 0 : i32
    %c0_i32_1 = arith.constant 0 : i32
    return %c0_i32, %c0_i32_0 : i32, i32
  }
  func.func @transform_6(%arg0: i32) -> (i32, i32) {
    %c0_i32 = arith.constant 0 : i32
    %c0_i32_0 = arith.constant 0 : i32
    %c0_i32_1 = arith.constant 0 : i32
    return %c0_i32, %c0_i32_0 : i32, i32
  }
  func.func @transform_7(%arg0: i32) -> (i32, i32) {
    %c0_i32 = arith.constant 0 : i32
    %c0_i32_0 = arith.constant 0 : i32
    return %arg0, %c0_i32 : i32, i32
  }
}

</mosaic_0001>

<llo_original>
// kernel: mnist_net_forward.1
$region0: #{mnist_net_forward.1}
  #allocation0 [shape = 'u32[]', space=smem, size = 0x4, offset = 0x4, fixed_abs, tag = 'smem constant byte address 0x4 - core index']
  #allocation1 [shape = 'u32[144,128]{1,0:T(1,128)}', space=vmem, size = 0x12000, scoped, tag = 'internal scratch']
  %s0 = inlined_call_operand.hbm [shape: f32[64,784], index: 0, kind: input, shape index: {}]
  %s1 = inlined_call_operand.hbm [shape: bf16[784,512], index: 1, kind: input, shape index: {}]
  %s2 = inlined_call_operand.hbm [shape: f32[1,512], index: 2, kind: input, shape index: {}]
  %s3 = inlined_call_operand.hbm [shape: bf16[512,128], index: 3, kind: input, shape index: {}]
  %s4 = inlined_call_operand.vmem [shape: f32[1,128], index: 4, kind: input, shape index: {}]
  %s5 = inlined_call_operand.hbm [shape: bf16[128,128], index: 5, kind: input, shape index: {}]
  %s6 = inlined_call_operand.vmem [shape: f32[1,128], index: 6, kind: input, shape index: {}]
  %s7 = inlined_call_operand.vmem [shape: f32[64,128], index: 7, kind: output, shape index: {}]
  %s8 = sld [smem:[#allocation0]]
  $region81: #{mnist_net_forward.1} parent=0
    _
  %s10 = ssub.s32 1, %s8
  %s11 = scalar_select 0, %s10, %s8
  $region1: #{mnist_net_forward.1} parent=0
    #allocation2 [shape = 'u8[229376]{0}', space=vmem, size = 0x38000, scoped, tag = 'input window, operand 0']
    #allocation3 [shape = 's32[2]{0}', space=sflag, size = 0x8, scoped, tag = 'scoped memory for mnist_net_forward.1']
    #allocation4 [shape = 'u8[802816]{0}', space=vmem, size = 0xc4000, scoped, tag = 'input window, operand 1, single buffered']
    #allocation5 [shape = 's32[1]{0}', space=sflag, size = 0x4, scoped, tag = 'scoped memory for mnist_net_forward.1']
    #allocation6 [shape = 'u8[2048]{0}', space=vmem, size = 0x800, scoped, tag = 'input window, operand 2, single buffered']
    #allocation7 [shape = 'u8[131072]{0}', space=vmem, size = 0x20000, scoped, tag = 'input window, operand 3, single buffered']
    #allocation8 [shape = 's32[1]{0}', space=sflag, size = 0x4, scoped, tag = 'scoped memory for mnist_net_forward.1']
    #allocation9 [shape = 'u8[32768]{0}', space=vmem, size = 0x8000, scoped, tag = 'input window, operand 5, single buffered']
    %12 = vsyncpa [#allocation3], 0
    %s13 = scalar_lea.sflag [#allocation3], 1
    %14 = vsyncpa %s13, 0
    %15 = vsyncpa [#allocation5], 0
    %16 = vsyncpa [#allocation8], 0
    loop: start=0, step=1, limit=4
    $region2: #{mnist_net_forward.1} parent=1 // loop_pre_header
      _
    $region3: #{mnist_net_forward.1} parent=1 // loop_header
      %s18 = sphi 0, %s22
      %p19 = scmp.ge.s32.totalorder %s18, 4
      %s28 = sphi 0, %s30
      %s31 = sphi 0, %s28
      %s32 = sphi 0, %s31
      %s48 = sphi 0, %s32
      %s52 = sphi 0, %s52
      %s54 = sphi 0, %s52
      %s55 = sphi 0, %s54
      %s69 = sphi 0, %s55
      %s73 = sphi 0, %s73
      %s75 = sphi 0, %s73
      %s76 = sphi 0, %s75
      %s90 = sphi 0, %s76
      %s94 = sphi 0, %s94
      %s96 = sphi 0, %s94
      %s97 = sphi 0, %s96
      %s111 = sphi 0, %s97
      %s115 = sphi 0, %s115
      %s117 = sphi 0, %s115
      %s118 = sphi 0, %s117
      %s132 = sphi 0, %s118
      %s136 = sphi 0, %s136
      %s138 = sphi 0, %s136
      %s139 = sphi 0, %s138
      %s153 = sphi 0, %s139
      %s157 = sphi 0, %s157
      %s159 = sphi 0, %s157
      %s160 = sphi 0, %s159
      %s174 = sphi 0, %s160
      %s180 = sphi 0, %s182
      %s183 = sphi 0, %s180
      %s184 = sphi 0, %s183
      %s200 = sphi 0, %s184
    $region4: #{mnist_net_forward.1} parent=1 // loop_header_branch
      %21 = sbr.rel (%p19) target = $region8
    $region5: #{mnist_net_forward.1} parent=1 // loop_body
      %s23 = ssub.s32 %s18, 1
      %s24 = ssub.s32 %s18, 2
      %s25 = sadd.s32 %s18, 1
      %s26 = ssub.s32 %s18, %s25
      %p27 = scmp.eq.s32.totalorder %s26, 0
      %s29 = sadd.s32 %s28, 1
      %s30 = scalar_select %p27, %s28, %s29
      %p33 = pneg %p27
      %p34 = scmp.eq.s32.totalorder %s18, 1
      %p35 = por %p33, %p34
      %p36 = scmp.ne.s32.totalorder %s28, %s31
      %p37 = scmp.eq.s32.totalorder %s18, 0
      %p38 = por %p36, %p37
      %p39 = scmp.ne.s32.totalorder %s28, %s31
      %p40 = scmp.eq.s32.totalorder %s23, 1
      %p41 = por %p39, %p40
      %p42 = scmp.ne.s32.totalorder %s31, %s32
      %p43 = scmp.eq.s32.totalorder %s23, 0
      %p44 = por %p42, %p43
      %p45 = scmp.ne.s32.totalorder %s31, %s32
      %p46 = scmp.eq.s32.totalorder %s24, 1
      %p47 = por %p45, %p46
      %p49 = scmp.ne.s32.totalorder %s32, %s48
      %p50 = scmp.eq.s32.totalorder %s24, 0
      %p51 = por %p49, %p50
      %s53 = sadd.s32 %s52, 1
      %p56 = scmp.eq.s32.totalorder %s18, 1
      %p57 = scmp.ne.s32.totalorder %s52, %s54
      %p58 = scmp.eq.s32.totalorder %s18, 0
      %p59 = por %p57, %p58
      %p60 = scmp.ne.s32.totalorder %s52, %s54
      %p61 = scmp.eq.s32.totalorder %s23, 1
      %p62 = por %p60, %p61
      %p63 = scmp.ne.s32.totalorder %s54, %s55
      %p64 = scmp.eq.s32.totalorder %s23, 0
      %p65 = por %p63, %p64
      %p66 = scmp.ne.s32.totalorder %s54, %s55
      %p67 = scmp.eq.s32.totalorder %s24, 1
      %p68 = por %p66, %p67
      %p70 = scmp.ne.s32.totalorder %s55, %s69
      %p71 = scmp.eq.s32.totalorder %s24, 0
      %p72 = por %p70, %p71
      %s74 = sadd.s32 %s73, 1
      %p77 = scmp.eq.s32.totalorder %s18, 1
      %p78 = scmp.ne.s32.totalorder %s73, %s75
      %p79 = scmp.eq.s32.totalorder %s18, 0
      %p80 = por %p78, %p79
      %p81 = scmp.ne.s32.totalorder %s73, %s75
      %p82 = scmp.eq.s32.totalorder %s23, 1
      %p83 = por %p81, %p82
      %p84 = scmp.ne.s32.totalorder %s75, %s76
      %p85 = scmp.eq.s32.totalorder %s23, 0
      %p86 = por %p84, %p85
      %p87 = scmp.ne.s32.totalorder %s75, %s76
      %p88 = scmp.eq.s32.totalorder %s24, 1
      %p89 = por %p87, %p88
      %p91 = scmp.ne.s32.totalorder %s76, %s90
      %p92 = scmp.eq.s32.totalorder %s24, 0
      %p93 = por %p91, %p92
      %s95 = sadd.s32 %s94, 1
      %p98 = scmp.eq.s32.totalorder %s18, 1
      %p99 = scmp.ne.s32.totalorder %s94, %s96
      %p100 = scmp.eq.s32.totalorder %s18, 0
      %p101 = por %p99, %p100
      %p102 = scmp.ne.s32.totalorder %s94, %s96
      %p103 = scmp.eq.s32.totalorder %s23, 1
      %p104 = por %p102, %p103
      %p105 = scmp.ne.s32.totalorder %s96, %s97
      %p106 = scmp.eq.s32.totalorder %s23, 0
      %p107 = por %p105, %p106
      %p108 = scmp.ne.s32.totalorder %s96, %s97
      %p109 = scmp.eq.s32.totalorder %s24, 1
      %p110 = por %p108, %p109
      %p112 = scmp.ne.s32.totalorder %s97, %s111
      %p113 = scmp.eq.s32.totalorder %s24, 0
      %p114 = por %p112, %p113
      %s116 = sadd.s32 %s115, 1
      %p119 = scmp.eq.s32.totalorder %s18, 1
      %p120 = scmp.ne.s32.totalorder %s115, %s117
      %p121 = scmp.eq.s32.totalorder %s18, 0
      %p122 = por %p120, %p121
      %p123 = scmp.ne.s32.totalorder %s115, %s117
      %p124 = scmp.eq.s32.totalorder %s23, 1
      %p125 = por %p123, %p124
      %p126 = scmp.ne.s32.totalorder %s117, %s118
      %p127 = scmp.eq.s32.totalorder %s23, 0
      %p128 = por %p126, %p127
      %p129 = scmp.ne.s32.totalorder %s117, %s118
      %p130 = scmp.eq.s32.totalorder %s24, 1
      %p131 = por %p129, %p130
      %p133 = scmp.ne.s32.totalorder %s118, %s132
      %p134 = scmp.eq.s32.totalorder %s24, 0
      %p135 = por %p133, %p134
      %s137 = sadd.s32 %s136, 1
      %p140 = scmp.eq.s32.totalorder %s18, 1
      %p141 = scmp.ne.s32.totalorder %s136, %s138
      %p142 = scmp.eq.s32.totalorder %s18, 0
      %p143 = por %p141, %p142
      %p144 = scmp.ne.s32.totalorder %s136, %s138
      %p145 = scmp.eq.s32.totalorder %s23, 1
      %p146 = por %p144, %p145
      %p147 = scmp.ne.s32.totalorder %s138, %s139
      %p148 = scmp.eq.s32.totalorder %s23, 0
      %p149 = por %p147, %p148
      %p150 = scmp.ne.s32.totalorder %s138, %s139
      %p151 = scmp.eq.s32.totalorder %s24, 1
      %p152 = por %p150, %p151
      %p154 = scmp.ne.s32.totalorder %s139, %s153
      %p155 = scmp.eq.s32.totalorder %s24, 0
      %p156 = por %p154, %p155
      %s158 = sadd.s32 %s157, 1
      %p161 = scmp.eq.s32.totalorder %s18, 1
      %p162 = scmp.ne.s32.totalorder %s157, %s159
      %p163 = scmp.eq.s32.totalorder %s18, 0
      %p164 = por %p162, %p163
      %p165 = scmp.ne.s32.totalorder %s157, %s159
      %p166 = scmp.eq.s32.totalorder %s23, 1
      %p167 = por %p165, %p166
      %p168 = scmp.ne.s32.totalorder %s159, %s160
      %p169 = scmp.eq.s32.totalorder %s23, 0
      %p170 = por %p168, %p169
      %p171 = scmp.ne.s32.totalorder %s159, %s160
      %p172 = scmp.eq.s32.totalorder %s24, 1
      %p173 = por %p171, %p172
      %p175 = scmp.ne.s32.totalorder %s160, %s174
      %p176 = scmp.eq.s32.totalorder %s24, 0
      %p177 = por %p175, %p176
      %s178 = ssub.s32 %s18, %s25
      %p179 = scmp.eq.s32.totalorder %s178, 0
      %s181 = sadd.s32 %s180, 1
      %s182 = scalar_select %p179, %s180, %s181
      %p185 = pneg %p179
      %p186 = scmp.eq.s32.totalorder %s18, 1
      %p187 = por %p185, %p186
      %p188 = scmp.ne.s32.totalorder %s180, %s183
      %p189 = scmp.eq.s32.totalorder %s18, 0
      %p190 = por %p188, %p189
      %p191 = scmp.ne.s32.totalorder %s180, %s183
      %p192 = scmp.eq.s32.totalorder %s23, 1
      %p193 = por %p191, %p192
      %p194 = scmp.ne.s32.totalorder %s183, %s184
      %p195 = scmp.eq.s32.totalorder %s23, 0
      %p196 = por %p194, %p195
      %p197 = scmp.ne.s32.totalorder %s183, %s184
      %p198 = scmp.eq.s32.totalorder %s24, 1
      %p199 = por %p197, %p198
      %p201 = scmp.ne.s32.totalorder %s184, %s200
      %p202 = scmp.eq.s32.totalorder %s24, 0
      %p203 = por %p201, %p202
      %p204 = scmp.le.s32.totalorder 1, %s18
      %p205 = scmp.lt.s32.totalorder %s18, 3
      %p206 = pnand %p204, %p205
      %p207 = pneg %p206
      // Predicated region
      $region9: #{mnist_net_forward.1} parent=5 // pred_check
        _
      $region10: #{mnist_net_forward.1} parent=5 // pred_check_branch
        %209 = sbr.rel (%p206) target = $region12
      $region11: #{mnist_net_forward.1} parent=5 // pred_region
        %s210 = ssub.s32 %s18, 1
        // Predicated region
        $region13: #{mnist_net_forward.1} parent=11 // pred_check
          %p211 = pneg %p65
        $region14: #{mnist_net_forward.1} parent=11 // pred_check_branch
          %213 = sbr.rel (%p211) target = $region16
        $region15: #{mnist_net_forward.1} parent=11 // pred_region
          %s215 = ssub.s32 25088, 25088
          %216 = vsyncadd [#allocation5], %s215
          %s217 = sshll.u32 [#allocation4], 4
          %s218 = int_to_ptr.vmem [resolvable:$true] %s217
          %223 = dma.hbm_to_vmem [thread:$0]  %s1, 25088, %s218, [#allocation5], 256, 256, 16
        $region16: #{mnist_net_forward.1} parent=11 // pred_fallthru
          _
        // Predicated region
        $region17: #{mnist_net_forward.1} parent=11 // pred_check
          %p224 = pneg %p86
        $region18: #{mnist_net_forward.1} parent=11 // pred_check_branch
          %226 = sbr.rel (%p224) target = $region20
        $region19: #{mnist_net_forward.1} parent=11 // pred_region
          %s228 = ssub.s32 64, 64
          %229 = vsyncadd [#allocation5], %s228
          %s231 = sshll.u32 [#allocation6], 4
          %s232 = int_to_ptr.vmem [resolvable:$true] %s231
          %234 = dma.hbm_to_vmem [thread:$0]  %s2, 64, %s232, [#allocation5]
        $region20: #{mnist_net_forward.1} parent=11 // pred_fallthru
          _
        // Predicated region
        $region21: #{mnist_net_forward.1} parent=11 // pred_check
          %p235 = pneg %p107
        $region22: #{mnist_net_forward.1} parent=11 // pred_check_branch
          %237 = sbr.rel (%p235) target = $region24
        $region23: #{mnist_net_forward.1} parent=11 // pred_region
          %s239 = ssub.s32 4096, 4096
          %240 = vsyncadd [#allocation8], %s239
          %s241 = sshll.u32 [#allocation7], 4
          %s242 = int_to_ptr.vmem [resolvable:$true] %s241
          %247 = dma.hbm_to_vmem [thread:$0]  %s3, 4096, %s242, [#allocation8], 64, 64, 4
        $region24: #{mnist_net_forward.1} parent=11 // pred_fallthru
          _
        // Predicated region
        $region25: #{mnist_net_forward.1} parent=11 // pred_check
          %p248 = pneg %p128
        $region26: #{mnist_net_forward.1} parent=11 // pred_check_branch
          %250 = sbr.rel (%p248) target = $region28
        $region27: #{mnist_net_forward.1} parent=11 // pred_region
          _
        $region28: #{mnist_net_forward.1} parent=11 // pred_fallthru
          _
        // Predicated region
        $region29: #{mnist_net_forward.1} parent=11 // pred_check
          %p251 = pneg %p149
        $region30: #{mnist_net_forward.1} parent=11 // pred_check_branch
          %253 = sbr.rel (%p251) target = $region32
        $region31: #{mnist_net_forward.1} parent=11 // pred_region
          %s255 = ssub.s32 1024, 1024
          %256 = vsyncadd [#allocation8], %s255
          %s257 = sshll.u32 [#allocation9], 4
          %s258 = int_to_ptr.vmem [resolvable:$true] %s257
          %263 = dma.hbm_to_vmem [thread:$0]  %s5, 1024, %s258, [#allocation8], 64, 64, 4
        $region32: #{mnist_net_forward.1} parent=11 // pred_fallthru
          _
        // Predicated region
        $region33: #{mnist_net_forward.1} parent=11 // pred_check
          %p264 = pneg %p170
        $region34: #{mnist_net_forward.1} parent=11 // pred_check_branch
          %266 = sbr.rel (%p264) target = $region36
        $region35: #{mnist_net_forward.1} parent=11 // pred_region
          _
        $region36: #{mnist_net_forward.1} parent=11 // pred_fallthru
          _
      $region12: #{mnist_net_forward.1} parent=5 // pred_fallthru
        _
      %p267 = scmp.lt.s32.totalorder %s18, 2
      // Predicated region
      $region37: #{mnist_net_forward.1} parent=5 // pred_check
        %p268 = pneg %p267
      $region38: #{mnist_net_forward.1} parent=5 // pred_check_branch
        %270 = sbr.rel (%p268) target = $region40
      $region39: #{mnist_net_forward.1} parent=5 // pred_region
        // Predicated region
        $region41: #{mnist_net_forward.1} parent=39 // pred_check
          %p271 = pneg %p38
        $region42: #{mnist_net_forward.1} parent=39 // pred_check_branch
          %273 = sbr.rel (%p271) target = $region44
        $region43: #{mnist_net_forward.1} parent=39 // pred_region
          %s274 = sand.u32 %s28, 1
          %s275 = scalar_lea.sflag [#allocation3], %s274
          %s276 = sand.u32 %s28, 1
          %s277 = smul.addr %s276, 224
          %s278 = scalar_lea.vmem [#allocation2], %s277
          %s279 = smul.u32 4, %s18
          %s281 = ssub.s32 3584, 3584
          %282 = vsyncadd %s275, %s281
          %s283 = smul.addr %s279, 7
          %s284 = smul.addr %s283, 128
          %s285 = scalar_lea.hbm %s0, %s284
          %s286 = sshll.u32 %s278, 4
          %s287 = int_to_ptr.vmem [resolvable:$true] %s286
          %292 = dma.hbm_to_vmem [thread:$0]  %s285, 3584, %s287, %s275, 896, 896, 56
        $region44: #{mnist_net_forward.1} parent=39 // pred_fallthru
          _
      $region40: #{mnist_net_forward.1} parent=5 // pred_fallthru
        _
      %p293 = scmp.le.s32.totalorder 1, %s18
      %p294 = scmp.lt.s32.totalorder %s18, 3
      %p295 = pnand %p293, %p294
      %p296 = pneg %p295
      // Predicated region
      $region45: #{mnist_net_forward.1} parent=5 // pred_check
        _
      $region46: #{mnist_net_forward.1} parent=5 // pred_check_branch
        %298 = sbr.rel (%p295) target = $region48
      $region47: #{mnist_net_forward.1} parent=5 // pred_region
        %s299 = ssub.s32 %s18, 1
        %s300 = sand.u32 %s31, 1
        %s301 = scalar_lea.sflag [#allocation3], %s300
        %s302 = sand.u32 %s31, 1
        %s303 = smul.addr %s302, 224
        %s304 = scalar_lea.vmem [#allocation2], %s303
        // Predicated region
        $region49: #{mnist_net_forward.1} parent=47 // pred_check
          %p305 = pneg %p44
        $region50: #{mnist_net_forward.1} parent=47 // pred_check_branch
          %307 = sbr.rel (%p305) target = $region52
        $region51: #{mnist_net_forward.1} parent=47 // pred_region
          %308 = dma.done %s301, 3584
        $region52: #{mnist_net_forward.1} parent=47 // pred_fallthru
          _
        // Predicated region
        $region53: #{mnist_net_forward.1} parent=47 // pred_check
          %p309 = pneg %p65
        $region54: #{mnist_net_forward.1} parent=47 // pred_check_branch
          %311 = sbr.rel (%p309) target = $region56
        $region55: #{mnist_net_forward.1} parent=47 // pred_region
          %312 = dma.done [#allocation5], 25088
        $region56: #{mnist_net_forward.1} parent=47 // pred_fallthru
          _
        // Predicated region
        $region57: #{mnist_net_forward.1} parent=47 // pred_check
          %p313 = pneg %p86
        $region58: #{mnist_net_forward.1} parent=47 // pred_check_branch
          %315 = sbr.rel (%p313) target = $region60
        $region59: #{mnist_net_forward.1} parent=47 // pred_region
          %316 = dma.done [#allocation5], 64
        $region60: #{mnist_net_forward.1} parent=47 // pred_fallthru
          _
        // Predicated region
        $region61: #{mnist_net_forward.1} parent=47 // pred_check
          %p317 = pneg %p107
        $region62: #{mnist_net_forward.1} parent=47 // pred_check_branch
          %319 = sbr.rel (%p317) target = $region64
        $region63: #{mnist_net_forward.1} parent=47 // pred_region
          %320 = dma.done [#allocation8], 4096
        $region64: #{mnist_net_forward.1} parent=47 // pred_fallthru
          _
        // Predicated region
        $region65: #{mnist_net_forward.1} parent=47 // pred_check
          %p321 = pneg %p149
        $region66: #{mnist_net_forward.1} parent=47 // pred_check_branch
          %323 = sbr.rel (%p321) target = $region68
        $region67: #{mnist_net_forward.1} parent=47 // pred_region
          %324 = dma.done [#allocation8], 1024
        $region68: #{mnist_net_forward.1} parent=47 // pred_fallthru
          _
        %s325 = sand.u32 %s31, 1
        %s326 = scalar_lea.sflag [#allocation3], %s325
        %s327 = sand.u32 %s31, 1
        %s328 = smul.addr %s327, 224
        %s329 = scalar_lea.vmem [#allocation2], %s328
        %p330 = pneg %p44
        %p331 = pneg %p41
        %p332 = pneg %p65
        %p333 = pneg %p62
        %p334 = pneg %p86
        %p335 = pneg %p83
        %p336 = pneg %p107
        %p337 = pneg %p104
        %p338 = pneg %p128
        %p339 = pneg %p125
        %p340 = pneg %p149
        %p341 = pneg %p146
        %p342 = pneg %p170
        %p343 = pneg %p167
        %p344 = pneg %p196
        %p345 = pneg %p193
        %s346 = smul.u32 4, %s23
        %p347 = scmp.lt.s32.totalorder %s346, 7
        %s348 = scalar_select %p347, %s346, 7
        %s349 = smul.addr %s348, 8
        %s350 = scalar_lea.vmem %s7, %s349
        %s351 = smul.u32 4, %s23
        %s352 = smul.u32 4, %s23
        %p353 = scmp.lt.s32.totalorder %s352, 7
        %s354 = scalar_select %p353, %s352, 7
        %s355 = smul.addr %s354, 8
        %s356 = scalar_lea.vmem %s7, %s355
        %s357 = smul.u32 4, %s23
        %v359 = vld [vmem:[%s304] sm:$0xff]
        %v360 = vld [vmem:[%s304 + $0x8] sm:$0xff]
        %v361 = vld [vmem:[%s304 + $0x10] sm:$0xff]
        %v362 = vld [vmem:[%s304 + $0x18] sm:$0xff]
        %v363 = vld [vmem:[%s304 + $0x20] sm:$0xff]
        %v364 = vld [vmem:[%s304 + $0x28] sm:$0xff]
        %v365 = vld [vmem:[%s304 + $0x30] sm:$0xff]
        %v366 = vld [vmem:[%s304 + $0x38] sm:$0xff]
        %v367 = vld [vmem:[%s304 + $0x40] sm:$0xff]
        %v368 = vld [vmem:[%s304 + $0x48] sm:$0xff]
        %v369 = vld [vmem:[%s304 + $0x50] sm:$0xff]
        %v370 = vld [vmem:[%s304 + $0x58] sm:$0xff]
        %v371 = vld [vmem:[%s304 + $0x60] sm:$0xff]
        %v372 = vld [vmem:[%s304 + $0x68] sm:$0xff]
        %v373 = vld [vmem:[%s304 + $0x70] sm:$0xff]
        %v374 = vld [vmem:[%s304 + $0x78] sm:$0xff]
        %v375 = vld [vmem:[%s304 + $0x80] sm:$0xff]
        %v376 = vld [vmem:[%s304 + $0x88] sm:$0xff]
        %v377 = vld [vmem:[%s304 + $0x90] sm:$0xff]
        %v378 = vld [vmem:[%s304 + $0x98] sm:$0xff]
        %v379 = vld [vmem:[%s304 + $0xa0] sm:$0xff]
        %v380 = vld [vmem:[%s304 + $0xa8] sm:$0xff]
        %v381 = vld [vmem:[%s304 + $0xb0] sm:$0xff]
        %v382 = vld [vmem:[%s304 + $0xb8] sm:$0xff]
        %v383 = vld [vmem:[%s304 + $0xc0] sm:$0xff]
        %v384 = vld [vmem:[%s304 + $0xc8] sm:$0xff]
        %v385 = vld [vmem:[%s304 + $0xd0] sm:$0xff]
        %v386 = vld [vmem:[%s304 + $0xd8] sm:$0xff]
        %v387 = vpack.c.bf16 %v366, %v359
        %v388 = vpack.c.bf16 %v367, %v360
        %v389 = vpack.c.bf16 %v368, %v361
        %v390 = vpack.c.bf16 %v369, %v362
        %v391 = vpack.c.bf16 %v370, %v363
        %v392 = vpack.c.bf16 %v371, %v364
        %v393 = vpack.c.bf16 %v372, %v365
        %v394 = vpack.c.bf16 %v380, %v373
        %v395 = vpack.c.bf16 %v381, %v374
        %v396 = vpack.c.bf16 %v382, %v375
        %v397 = vpack.c.bf16 %v383, %v376
        %v398 = vpack.c.bf16 %v384, %v377
        %v399 = vpack.c.bf16 %v385, %v378
        %v400 = vpack.c.bf16 %v386, %v379
        %v401 = vld [vmem:[#allocation4] sm:$0xff]
        %v402 = vld [vmem:[#allocation4 + $0x8] sm:$0xff]
        %v403 = vld [vmem:[#allocation4 + $0x10] sm:$0xff]
        %v404 = vld [vmem:[#allocation4 + $0x18] sm:$0xff]
        %v405 = vld [vmem:[#allocation4 + $0x20] sm:$0xff]
        %v406 = vld [vmem:[#allocation4 + $0x28] sm:$0xff]
        %v407 = vld [vmem:[#allocation4 + $0x30] sm:$0xff]
        %v408 = vld [vmem:[#allocation4 + $0x38] sm:$0xff]
        %v409 = vld [vmem:[#allocation4 + $0x40] sm:$0xff]
        %v410 = vld [vmem:[#allocation4 + $0x48] sm:$0xff]
        %v411 = vld [vmem:[#allocation4 + $0x50] sm:$0xff]
        %v412 = vld [vmem:[#allocation4 + $0x58] sm:$0xff]
        %v413 = vld [vmem:[#allocation4 + $0x60] sm:$0xff]
        %v414 = vld [vmem:[#allocation4 + $0x68] sm:$0xff]
        %v415 = vld [vmem:[#allocation4 + $0x70] sm:$0xff]
        %v416 = vld [vmem:[#allocation4 + $0x78] sm:$0xff]
        %v417 = vld [vmem:[#allocation4 + $0x80] sm:$0xff]
        %v418 = vld [vmem:[#allocation4 + $0x88] sm:$0xff]
        %v419 = vld [vmem:[#allocation4 + $0x90] sm:$0xff]
        %v420 = vld [vmem:[#allocation4 + $0x98] sm:$0xff]
        %v421 = vld [vmem:[#allocation4 + $0xa0] sm:$0xff]
        %v422 = vld [vmem:[#allocation4 + $0xa8] sm:$0xff]
        %v423 = vld [vmem:[#allocation4 + $0xb0] sm:$0xff]
        %v424 = vld [vmem:[#allocation4 + $0xb8] sm:$0xff]
        %v425 = vld [vmem:[#allocation4 + $0xc0] sm:$0xff]
        %v426 = vld [vmem:[#allocation4 + $0xc8] sm:$0xff]
        %v427 = vld [vmem:[#allocation4 + $0xd0] sm:$0xff]
        %v428 = vld [vmem:[#allocation4 + $0xd8] sm:$0xff]
        %v429 = vld [vmem:[#allocation4 + $0xe0] sm:$0xff]
        %v430 = vld [vmem:[#allocation4 + $0xe8] sm:$0xff]
        %v431 = vld [vmem:[#allocation4 + $0xf0] sm:$0xff]
        %v432 = vld [vmem:[#allocation4 + $0xf8] sm:$0xff]
        %v433 = vld [vmem:[#allocation4 + $0x100] sm:$0xff]
        %v434 = vld [vmem:[#allocation4 + $0x108] sm:$0xff]
        %v435 = vld [vmem:[#allocation4 + $0x110] sm:$0xff]
        %v436 = vld [vmem:[#allocation4 + $0x118] sm:$0xff]
        %v437 = vld [vmem:[#allocation4 + $0x120] sm:$0xff]
        %v438 = vld [vmem:[#allocation4 + $0x128] sm:$0xff]
        %v439 = vld [vmem:[#allocation4 + $0x130] sm:$0xff]
        %v440 = vld [vmem:[#allocation4 + $0x138] sm:$0xff]
        %v441 = vld [vmem:[#allocation4 + $0x140] sm:$0xff]
        %v442 = vld [vmem:[#allocation4 + $0x148] sm:$0xff]
        %v443 = vld [vmem:[#allocation4 + $0x150] sm:$0xff]
        %v444 = vld [vmem:[#allocation4 + $0x158] sm:$0xff]
        %v445 = vld [vmem:[#allocation4 + $0x160] sm:$0xff]
        %v446 = vld [vmem:[#allocation4 + $0x168] sm:$0xff]
        %v447 = vld [vmem:[#allocation4 + $0x170] sm:$0xff]
        %v448 = vld [vmem:[#allocation4 + $0x178] sm:$0xff]
        %v449 = vld [vmem:[#allocation4 + $0x180] sm:$0xff]
        %v450 = vld [vmem:[#allocation4 + $0x188] sm:$0xff]
        %v451 = vld [vmem:[#allocation4 + $0x190] sm:$0xff]
        %v452 = vld [vmem:[#allocation4 + $0x198] sm:$0xff]
        %v453 = vld [vmem:[#allocation4 + $0x1a0] sm:$0xff]
        %v454 = vld [vmem:[#allocation4 + $0x1a8] sm:$0xff]
        %v455 = vld [vmem:[#allocation4 + $0x1b0] sm:$0xff]
        %v456 = vld [vmem:[#allocation4 + $0x1b8] sm:$0xff]
        %v457 = vld [vmem:[#allocation4 + $0x1c0] sm:$0xff]
        %v458 = vld [vmem:[#allocation4 + $0x1c8] sm:$0xff]
        %v459 = vld [vmem:[#allocation4 + $0x1d0] sm:$0xff]
        %v460 = vld [vmem:[#allocation4 + $0x1d8] sm:$0xff]
        %v461 = vld [vmem:[#allocation4 + $0x1e0] sm:$0xff]
        %v462 = vld [vmem:[#allocation4 + $0x1e8] sm:$0xff]
        %v463 = vld [vmem:[#allocation4 + $0x1f0] sm:$0xff]
        %v464 = vld [vmem:[#allocation4 + $0x1f8] sm:$0xff]
        %v465 = vld [vmem:[#allocation4 + $0x200] sm:$0xff]
        %v466 = vld [vmem:[#allocation4 + $0x208] sm:$0xff]
        %v467 = vld [vmem:[#allocation4 + $0x210] sm:$0xff]
        %v468 = vld [vmem:[#allocation4 + $0x218] sm:$0xff]
        %v469 = vld [vmem:[#allocation4 + $0x220] sm:$0xff]
        %v470 = vld [vmem:[#allocation4 + $0x228] sm:$0xff]
        %v471 = vld [vmem:[#allocation4 + $0x230] sm:$0xff]
        %v472 = vld [vmem:[#allocation4 + $0x238] sm:$0xff]
        %v473 = vld [vmem:[#allocation4 + $0x240] sm:$0xff]
        %v474 = vld [vmem:[#allocation4 + $0x248] sm:$0xff]
        %v475 = vld [vmem:[#allocation4 + $0x250] sm:$0xff]
        %v476 = vld [vmem:[#allocation4 + $0x258] sm:$0xff]
        %v477 = vld [vmem:[#allocation4 + $0x260] sm:$0xff]
        %v478 = vld [vmem:[#allocation4 + $0x268] sm:$0xff]
        %v479 = vld [vmem:[#allocation4 + $0x270] sm:$0xff]
        %v480 = vld [vmem:[#allocation4 + $0x278] sm:$0xff]
        %v481 = vld [vmem:[#allocation4 + $0x280] sm:$0xff]
        %v482 = vld [vmem:[#allocation4 + $0x288] sm:$0xff]
        %v483 = vld [vmem:[#allocation4 + $0x290] sm:$0xff]
        %v484 = vld [vmem:[#allocation4 + $0x298] sm:$0xff]
        %v485 = vld [vmem:[#allocation4 + $0x2a0] sm:$0xff]
        %v486 = vld [vmem:[#allocation4 + $0x2a8] sm:$0xff]
        %v487 = vld [vmem:[#allocation4 + $0x2b0] sm:$0xff]
        %v488 = vld [vmem:[#allocation4 + $0x2b8] sm:$0xff]
        %v489 = vld [vmem:[#allocation4 + $0x2c0] sm:$0xff]
        %v490 = vld [vmem:[#allocation4 + $0x2c8] sm:$0xff]
        %v491 = vld [vmem:[#allocation4 + $0x2d0] sm:$0xff]
        %v492 = vld [vmem:[#allocation4 + $0x2d8] sm:$0xff]
        %v493 = vld [vmem:[#allocation4 + $0x2e0] sm:$0xff]
        %v494 = vld [vmem:[#allocation4 + $0x2e8] sm:$0xff]
        %v495 = vld [vmem:[#allocation4 + $0x2f0] sm:$0xff]
        %v496 = vld [vmem:[#allocation4 + $0x2f8] sm:$0xff]
        %v497 = vld [vmem:[#allocation4 + $0x300] sm:$0xff]
        %v498 = vld [vmem:[#allocation4 + $0x308] sm:$0xff]
        %v499 = vld [vmem:[#allocation4 + $0x310] sm:$0xff]
        %v500 = vld [vmem:[#allocation4 + $0x318] sm:$0xff]
        %v501 = vld [vmem:[#allocation4 + $0x320] sm:$0xff]
        %v502 = vld [vmem:[#allocation4 + $0x328] sm:$0xff]
        %v503 = vld [vmem:[#allocation4 + $0x330] sm:$0xff]
        %v504 = vld [vmem:[#allocation4 + $0x338] sm:$0xff]
        %v505 = vld [vmem:[#allocation4 + $0x340] sm:$0xff]
        %v506 = vld [vmem:[#allocation4 + $0x348] sm:$0xff]
        %v507 = vld [vmem:[#allocation4 + $0x350] sm:$0xff]
        %v508 = vld [vmem:[#allocation4 + $0x358] sm:$0xff]
        %v509 = vld [vmem:[#allocation4 + $0x360] sm:$0xff]
        %v510 = vld [vmem:[#allocation4 + $0x368] sm:$0xff]
        %v511 = vld [vmem:[#allocation4 + $0x370] sm:$0xff]
        %v512 = vld [vmem:[#allocation4 + $0x378] sm:$0xff]
        %v513 = vld [vmem:[#allocation4 + $0x380] sm:$0xff]
        %v514 = vld [vmem:[#allocation4 + $0x388] sm:$0xff]
        %v515 = vld [vmem:[#allocation4 + $0x390] sm:$0xff]
        %v516 = vld [vmem:[#allocation4 + $0x398] sm:$0xff]
        %v517 = vld [vmem:[#allocation4 + $0x3a0] sm:$0xff]
        %v518 = vld [vmem:[#allocation4 + $0x3a8] sm:$0xff]
        %v519 = vld [vmem:[#allocation4 + $0x3b0] sm:$0xff]
        %v520 = vld [vmem:[#allocation4 + $0x3b8] sm:$0xff]
        %v521 = vld [vmem:[#allocation4 + $0x3c0] sm:$0xff]
        %v522 = vld [vmem:[#allocation4 + $0x3c8] sm:$0xff]
        %v523 = vld [vmem:[#allocation4 + $0x3d0] sm:$0xff]
        %v524 = vld [vmem:[#allocation4 + $0x3d8] sm:$0xff]
        %v525 = vld [vmem:[#allocation4 + $0x3e0] sm:$0xff]
        %v526 = vld [vmem:[#allocation4 + $0x3e8] sm:$0xff]
        %v527 = vld [vmem:[#allocation4 + $0x3f0] sm:$0xff]
        %v528 = vld [vmem:[#allocation4 + $0x3f8] sm:$0xff]
        %v529 = vld [vmem:[#allocation4 + $0x400] sm:$0xff]
        %v530 = vld [vmem:[#allocation4 + $0x408] sm:$0xff]
        %v531 = vld [vmem:[#allocation4 + $0x410] sm:$0xff]
        %v532 = vld [vmem:[#allocation4 + $0x418] sm:$0xff]
        %v533 = vld [vmem:[#allocation4 + $0x420] sm:$0xff]
        %v534 = vld [vmem:[#allocation4 + $0x428] sm:$0xff]
        %v535 = vld [vmem:[#allocation4 + $0x430] sm:$0xff]
        %v536 = vld [vmem:[#allocation4 + $0x438] sm:$0xff]
        %v537 = vld [vmem:[#allocation4 + $0x440] sm:$0xff]
        %v538 = vld [vmem:[#allocation4 + $0x448] sm:$0xff]
        %v539 = vld [vmem:[#allocation4 + $0x450] sm:$0xff]
        %v540 = vld [vmem:[#allocation4 + $0x458] sm:$0xff]
        %v541 = vld [vmem:[#allocation4 + $0x460] sm:$0xff]
        %v542 = vld [vmem:[#allocation4 + $0x468] sm:$0xff]
        %v543 = vld [vmem:[#allocation4 + $0x470] sm:$0xff]
        %v544 = vld [vmem:[#allocation4 + $0x478] sm:$0xff]
        %v545 = vld [vmem:[#allocation4 + $0x480] sm:$0xff]
        %v546 = vld [vmem:[#allocation4 + $0x488] sm:$0xff]
        %v547 = vld [vmem:[#allocation4 + $0x490] sm:$0xff]
        %v548 = vld [vmem:[#allocation4 + $0x498] sm:$0xff]
        %v549 = vld [vmem:[#allocation4 + $0x4a0] sm:$0xff]
        %v550 = vld [vmem:[#allocation4 + $0x4a8] sm:$0xff]
        %v551 = vld [vmem:[#allocation4 + $0x4b0] sm:$0xff]
        %v552 = vld [vmem:[#allocation4 + $0x4b8] sm:$0xff]
        %v553 = vld [vmem:[#allocation4 + $0x4c0] sm:$0xff]
        %v554 = vld [vmem:[#allocation4 + $0x4c8] sm:$0xff]
        %v555 = vld [vmem:[#allocation4 + $0x4d0] sm:$0xff]
        %v556 = vld [vmem:[#allocation4 + $0x4d8] sm:$0xff]
        %v557 = vld [vmem:[#allocation4 + $0x4e0] sm:$0xff]
        %v558 = vld [vmem:[#allocation4 + $0x4e8] sm:$0xff]
        %v559 = vld [vmem:[#allocation4 + $0x4f0] sm:$0xff]
        %v560 = vld [vmem:[#allocation4 + $0x4f8] sm:$0xff]
        %v561 = vld [vmem:[#allocation4 + $0x500] sm:$0xff]
        %v562 = vld [vmem:[#allocation4 + $0x508] sm:$0xff]
        %v563 = vld [vmem:[#allocation4 + $0x510] sm:$0xff]
        %v564 = vld [vmem:[#allocation4 + $0x518] sm:$0xff]
        %v565 = vld [vmem:[#allocation4 + $0x520] sm:$0xff]
        %v566 = vld [vmem:[#allocation4 + $0x528] sm:$0xff]
        %v567 = vld [vmem:[#allocation4 + $0x530] sm:$0xff]
        %v568 = vld [vmem:[#allocation4 + $0x538] sm:$0xff]
        %v569 = vld [vmem:[#allocation4 + $0x540] sm:$0xff]
        %v570 = vld [vmem:[#allocation4 + $0x548] sm:$0xff]
        %v571 = vld [vmem:[#allocation4 + $0x550] sm:$0xff]
        %v572 = vld [vmem:[#allocation4 + $0x558] sm:$0xff]
        %v573 = vld [vmem:[#allocation4 + $0x560] sm:$0xff]
        %v574 = vld [vmem:[#allocation4 + $0x568] sm:$0xff]
        %v575 = vld [vmem:[#allocation4 + $0x570] sm:$0xff]
        %v576 = vld [vmem:[#allocation4 + $0x578] sm:$0xff]
        %v577 = vld [vmem:[#allocation4 + $0x580] sm:$0xff]
        %v578 = vld [vmem:[#allocation4 + $0x588] sm:$0xff]
        %v579 = vld [vmem:[#allocation4 + $0x590] sm:$0xff]
        %v580 = vld [vmem:[#allocation4 + $0x598] sm:$0xff]
        %v581 = vld [vmem:[#allocation4 + $0x5a0] sm:$0xff]
        %v582 = vld [vmem:[#allocation4 + $0x5a8] sm:$0xff]
        %v583 = vld [vmem:[#allocation4 + $0x5b0] sm:$0xff]
        %v584 = vld [vmem:[#allocation4 + $0x5b8] sm:$0xff]
        %v585 = vld [vmem:[#allocation4 + $0x5c0] sm:$0xff]
        %v586 = vld [vmem:[#allocation4 + $0x5c8] sm:$0xff]
        %v587 = vld [vmem:[#allocation4 + $0x5d0] sm:$0xff]
        %v588 = vld [vmem:[#allocation4 + $0x5d8] sm:$0xff]
        %v589 = vld [vmem:[#allocation4 + $0x5e0] sm:$0xff]
        %v590 = vld [vmem:[#allocation4 + $0x5e8] sm:$0xff]
        %v591 = vld [vmem:[#allocation4 + $0x5f0] sm:$0xff]
        %v592 = vld [vmem:[#allocation4 + $0x5f8] sm:$0xff]
        %v593 = vld [vmem:[#allocation4 + $0x600] sm:$0xff]
        %v594 = vld [vmem:[#allocation4 + $0x608] sm:$0xff]
        %v595 = vld [vmem:[#allocation4 + $0x610] sm:$0xff]
        %v596 = vld [vmem:[#allocation4 + $0x618] sm:$0xff]
        %v597 = vld [vmem:[#allocation6] sm:$0xf]
        %v599 = vlaneseq
        %v600 = vshrl.u32 %v599, 7
        %v601 = vsub.s32 0, %v600
        %v602 = vrot.slane %v597, %v601
        %v603 = vlaneseq
        %v604 = vshrl.u32 %v603, 7
        %v605 = vsub.s32 1, %v604
        %v606 = vrot.slane %v597, %v605
        %v607 = vlaneseq
        %v608 = vshrl.u32 %v607, 7
        %v609 = vsub.s32 2, %v608
        %v610 = vrot.slane %v597, %v609
        %v611 = vlaneseq
        %v612 = vshrl.u32 %v611, 7
        %v613 = vsub.s32 3, %v612
        %v614 = vrot.slane %v597, %v613
        %v815 = vunpack.c.l.b16 %v401
        %v816 = vunpack.c.h.b16 %v401
        %v817 = vunpack.c.l.b16 %v402
        %v818 = vunpack.c.h.b16 %v402
        %v819 = vunpack.c.l.b16 %v403
        %v820 = vunpack.c.h.b16 %v403
        %v821 = vunpack.c.l.b16 %v404
        %v822 = vunpack.c.h.b16 %v404
        %v823 = vunpack.c.l.b16 %v405
        %v824 = vunpack.c.h.b16 %v405
        %v825 = vunpack.c.l.b16 %v406
        %v826 = vunpack.c.h.b16 %v406
        %v827 = vunpack.c.l.b16 %v407
        %v828 = vunpack.c.h.b16 %v407
        %v829 = vunpack.c.l.b16 %v408
        %v830 = vunpack.c.h.b16 %v408
        %v831 = vunpack.c.l.b16 %v409
        %v832 = vunpack.c.h.b16 %v409
        %v833 = vunpack.c.l.b16 %v410
        %v834 = vunpack.c.h.b16 %v410
        %v835 = vunpack.c.l.b16 %v411
        %v836 = vunpack.c.h.b16 %v411
        %v837 = vunpack.c.l.b16 %v412
        %v838 = vunpack.c.h.b16 %v412
        %v839 = vunpack.c.l.b16 %v413
        %v840 = vunpack.c.h.b16 %v413
        %v841 = vunpack.c.l.b16 %v414
        %v842 = vunpack.c.h.b16 %v414
        %v843 = vunpack.c.l.b16 %v415
        %v844 = vunpack.c.h.b16 %v415
        %v845 = vunpack.c.l.b16 %v416
        %v846 = vunpack.c.h.b16 %v416
        %v847 = vunpack.c.l.b16 %v417
        %v848 = vunpack.c.h.b16 %v417
        %v849 = vunpack.c.l.b16 %v418
        %v850 = vunpack.c.h.b16 %v418
        %v851 = vunpack.c.l.b16 %v419
        %v852 = vunpack.c.h.b16 %v419
        %v853 = vunpack.c.l.b16 %v420
        %v854 = vunpack.c.h.b16 %v420
        %v855 = vunpack.c.l.b16 %v421
        %v856 = vunpack.c.h.b16 %v421
        %v857 = vunpack.c.l.b16 %v422
        %v858 = vunpack.c.h.b16 %v422
        %v859 = vunpack.c.l.b16 %v423
        %v860 = vunpack.c.h.b16 %v423
        %v861 = vunpack.c.l.b16 %v424
        %v862 = vunpack.c.h.b16 %v424
        %v863 = vunpack.c.l.b16 %v425
        %v864 = vunpack.c.h.b16 %v425
        %v865 = vunpack.c.l.b16 %v426
        %v866 = vunpack.c.h.b16 %v426
        %v867 = vunpack.c.l.b16 %v427
        %v868 = vunpack.c.h.b16 %v427
        %v869 = vunpack.c.l.b16 %v428
        %v870 = vunpack.c.h.b16 %v428
        %v871 = vunpack.c.l.b16 %v429
        %v872 = vunpack.c.h.b16 %v429
        %v873 = vunpack.c.l.b16 %v430
        %v874 = vunpack.c.h.b16 %v430
        %v875 = vunpack.c.l.b16 %v431
        %v876 = vunpack.c.h.b16 %v431
        %v877 = vunpack.c.l.b16 %v432
        %v878 = vunpack.c.h.b16 %v432
        %v879 = vunpack.c.l.b16 %v433
        %v880 = vunpack.c.h.b16 %v433
        %v881 = vunpack.c.l.b16 %v434
        %v882 = vunpack.c.h.b16 %v434
        %v883 = vunpack.c.l.b16 %v435
        %v884 = vunpack.c.h.b16 %v435
        %v885 = vunpack.c.l.b16 %v436
        %v886 = vunpack.c.h.b16 %v436
        %v887 = vunpack.c.l.b16 %v437
        %v888 = vunpack.c.h.b16 %v437
        %v889 = vunpack.c.l.b16 %v438
        %v890 = vunpack.c.h.b16 %v438
        %v891 = vunpack.c.l.b16 %v439
        %v892 = vunpack.c.h.b16 %v439
        %v893 = vunpack.c.l.b16 %v440
        %v894 = vunpack.c.h.b16 %v440
        %v895 = vunpack.c.l.b16 %v441
        %v896 = vunpack.c.h.b16 %v441
        %v897 = vunpack.c.l.b16 %v442
        %v898 = vunpack.c.h.b16 %v442
        %v899 = vunpack.c.l.b16 %v443
        %v900 = vunpack.c.h.b16 %v443
        %v901 = vunpack.c.l.b16 %v444
        %v902 = vunpack.c.h.b16 %v444
        %v903 = vunpack.c.l.b16 %v445
        %v904 = vunpack.c.h.b16 %v445
        %v905 = vunpack.c.l.b16 %v446
        %v906 = vunpack.c.h.b16 %v446
        %v907 = vunpack.c.l.b16 %v447
        %v908 = vunpack.c.h.b16 %v447
        %v909 = vunpack.c.l.b16 %v448
        %v910 = vunpack.c.h.b16 %v448
        %v911 = vunpack.c.l.b16 %v449
        %v912 = vunpack.c.h.b16 %v449
        %v913 = vunpack.c.l.b16 %v450
        %v914 = vunpack.c.h.b16 %v450
        %v915 = vunpack.c.l.b16 %v451
        %v916 = vunpack.c.h.b16 %v451
        %v917 = vunpack.c.l.b16 %v452
        %v918 = vunpack.c.h.b16 %v452
        %v919 = vunpack.c.l.b16 %v453
        %v920 = vunpack.c.h.b16 %v453
        %v921 = vunpack.c.l.b16 %v454
        %v922 = vunpack.c.h.b16 %v454
        %v923 = vunpack.c.l.b16 %v455
        %v924 = vunpack.c.h.b16 %v455
        %v925 = vunpack.c.l.b16 %v456
        %v926 = vunpack.c.h.b16 %v456
        %v927 = vunpack.c.l.b16 %v457
        %v928 = vunpack.c.h.b16 %v457
        %v929 = vunpack.c.l.b16 %v458
        %v930 = vunpack.c.h.b16 %v458
        %v931 = vunpack.c.l.b16 %v459
        %v932 = vunpack.c.h.b16 %v459
        %v933 = vunpack.c.l.b16 %v460
        %v934 = vunpack.c.h.b16 %v460
        %v935 = vunpack.c.l.b16 %v461
        %v936 = vunpack.c.h.b16 %v461
        %v937 = vunpack.c.l.b16 %v462
        %v938 = vunpack.c.h.b16 %v462
        %v939 = vunpack.c.l.b16 %v463
        %v940 = vunpack.c.h.b16 %v463
        %v941 = vunpack.c.l.b16 %v464
        %v942 = vunpack.c.h.b16 %v464
        %v943 = vunpack.c.l.b16 %v465
        %v944 = vunpack.c.h.b16 %v465
        %v945 = vunpack.c.l.b16 %v466
        %v946 = vunpack.c.h.b16 %v466
        %v947 = vunpack.c.l.b16 %v467
        %v948 = vunpack.c.h.b16 %v467
        %v949 = vunpack.c.l.b16 %v468
        %v950 = vunpack.c.h.b16 %v468
        %v951 = vunpack.c.l.b16 %v469
        %v952 = vunpack.c.h.b16 %v469
        %v953 = vunpack.c.l.b16 %v470
        %v954 = vunpack.c.h.b16 %v470
        %v955 = vunpack.c.l.b16 %v471
        %v956 = vunpack.c.h.b16 %v471
        %v957 = vunpack.c.l.b16 %v472
        %v958 = vunpack.c.h.b16 %v472
        %v959 = vunpack.c.l.b16 %v473
        %v960 = vunpack.c.h.b16 %v473
        %v961 = vunpack.c.l.b16 %v474
        %v962 = vunpack.c.h.b16 %v474
        %v963 = vunpack.c.l.b16 %v475
        %v964 = vunpack.c.h.b16 %v475
        %v965 = vunpack.c.l.b16 %v476
        %v966 = vunpack.c.h.b16 %v476
        %v967 = vunpack.c.l.b16 %v477
        %v968 = vunpack.c.h.b16 %v477
        %v969 = vunpack.c.l.b16 %v478
        %v970 = vunpack.c.h.b16 %v478
        %v971 = vunpack.c.l.b16 %v479
        %v972 = vunpack.c.h.b16 %v479
        %v973 = vunpack.c.l.b16 %v480
        %v974 = vunpack.c.h.b16 %v480
        %v975 = vunpack.c.l.b16 %v481
        %v976 = vunpack.c.h.b16 %v481
        %v977 = vunpack.c.l.b16 %v482
        %v978 = vunpack.c.h.b16 %v482
        %v979 = vunpack.c.l.b16 %v483
        %v980 = vunpack.c.h.b16 %v483
        %v981 = vunpack.c.l.b16 %v484
        %v982 = vunpack.c.h.b16 %v484
        %v983 = vunpack.c.l.b16 %v485
        %v984 = vunpack.c.h.b16 %v485
        %v985 = vunpack.c.l.b16 %v486
        %v986 = vunpack.c.h.b16 %v486
        %v987 = vunpack.c.l.b16 %v487
        %v988 = vunpack.c.h.b16 %v487
        %v989 = vunpack.c.l.b16 %v488
        %v990 = vunpack.c.h.b16 %v488
        %v991 = vunpack.c.l.b16 %v489
        %v992 = vunpack.c.h.b16 %v489
        %v993 = vunpack.c.l.b16 %v490
        %v994 = vunpack.c.h.b16 %v490
        %v995 = vunpack.c.l.b16 %v491
        %v996 = vunpack.c.h.b16 %v491
        %v997 = vunpack.c.l.b16 %v492
        %v998 = vunpack.c.h.b16 %v492
        %v999 = vunpack.c.l.b16 %v493
        %v1000 = vunpack.c.h.b16 %v493
        %v1001 = vunpack.c.l.b16 %v494
        %v1002 = vunpack.c.h.b16 %v494
        %v1003 = vunpack.c.l.b16 %v495
        %v1004 = vunpack.c.h.b16 %v495
        %v1005 = vunpack.c.l.b16 %v496
        %v1006 = vunpack.c.h.b16 %v496
        %v1007 = vunpack.c.l.b16 %v497
        %v1008 = vunpack.c.h.b16 %v497
        %v1009 = vunpack.c.l.b16 %v498
        %v1010 = vunpack.c.h.b16 %v498
        %v1011 = vunpack.c.l.b16 %v499
        %v1012 = vunpack.c.h.b16 %v499
        %v1013 = vunpack.c.l.b16 %v500
        %v1014 = vunpack.c.h.b16 %v500
        %v1015 = vunpack.c.l.b16 %v501
        %v1016 = vunpack.c.h.b16 %v501
        %v1017 = vunpack.c.l.b16 %v502
        %v1018 = vunpack.c.h.b16 %v502
        %v1019 = vunpack.c.l.b16 %v503
        %v1020 = vunpack.c.h.b16 %v503
        %v1021 = vunpack.c.l.b16 %v504
        %v1022 = vunpack.c.h.b16 %v504
        %v1023 = vunpack.c.l.b16 %v505
        %v1024 = vunpack.c.h.b16 %v505
        %v1025 = vunpack.c.l.b16 %v506
        %v1026 = vunpack.c.h.b16 %v506
        %v1027 = vunpack.c.l.b16 %v507
        %v1028 = vunpack.c.h.b16 %v507
        %v1029 = vunpack.c.l.b16 %v508
        %v1030 = vunpack.c.h.b16 %v508
        %v1031 = vunpack.c.l.b16 %v509
        %v1032 = vunpack.c.h.b16 %v509
        %v1033 = vunpack.c.l.b16 %v510
        %v1034 = vunpack.c.h.b16 %v510
        %v1035 = vunpack.c.l.b16 %v511
        %v1036 = vunpack.c.h.b16 %v511
        %v1037 = vunpack.c.l.b16 %v512
        %v1038 = vunpack.c.h.b16 %v512
        %v1039 = vunpack.c.l.b16 %v513
        %v1040 = vunpack.c.h.b16 %v513
        %v1041 = vunpack.c.l.b16 %v514
        %v1042 = vunpack.c.h.b16 %v514
        %v1043 = vunpack.c.l.b16 %v515
        %v1044 = vunpack.c.h.b16 %v515
        %v1045 = vunpack.c.l.b16 %v516
        %v1046 = vunpack.c.h.b16 %v516
        %v1047 = vunpack.c.l.b16 %v517
        %v1048 = vunpack.c.h.b16 %v517
        %v1049 = vunpack.c.l.b16 %v518
        %v1050 = vunpack.c.h.b16 %v518
        %v1051 = vunpack.c.l.b16 %v519
        %v1052 = vunpack.c.h.b16 %v519
        %v1053 = vunpack.c.l.b16 %v520
        %v1054 = vunpack.c.h.b16 %v520
        %v1055 = vunpack.c.l.b16 %v521
        %v1056 = vunpack.c.h.b16 %v521
        %v1057 = vunpack.c.l.b16 %v522
        %v1058 = vunpack.c.h.b16 %v522
        %v1059 = vunpack.c.l.b16 %v523
        %v1060 = vunpack.c.h.b16 %v523
        %v1061 = vunpack.c.l.b16 %v524
        %v1062 = vunpack.c.h.b16 %v524
        %v1063 = vunpack.c.l.b16 %v525
        %v1064 = vunpack.c.h.b16 %v525
        %v1065 = vunpack.c.l.b16 %v526
        %v1066 = vunpack.c.h.b16 %v526
        %v1067 = vunpack.c.l.b16 %v527
        %v1068 = vunpack.c.h.b16 %v527
        %v1069 = vunpack.c.l.b16 %v528
        %v1070 = vunpack.c.h.b16 %v528
        %v1071 = vunpack.c.l.b16 %v529
        %v1072 = vunpack.c.h.b16 %v529
        %v1073 = vunpack.c.l.b16 %v530
        %v1074 = vunpack.c.h.b16 %v530
        %v1075 = vunpack.c.l.b16 %v531
        %v1076 = vunpack.c.h.b16 %v531
        %v1077 = vunpack.c.l.b16 %v532
        %v1078 = vunpack.c.h.b16 %v532
        %v1079 = vunpack.c.l.b16 %v533
        %v1080 = vunpack.c.h.b16 %v533
        %v1081 = vunpack.c.l.b16 %v534
        %v1082 = vunpack.c.h.b16 %v534
        %v1083 = vunpack.c.l.b16 %v535
        %v1084 = vunpack.c.h.b16 %v535
        %v1085 = vunpack.c.l.b16 %v536
        %v1086 = vunpack.c.h.b16 %v536
        %v1087 = vunpack.c.l.b16 %v537
        %v1088 = vunpack.c.h.b16 %v537
        %v1089 = vunpack.c.l.b16 %v538
        %v1090 = vunpack.c.h.b16 %v538
        %v1091 = vunpack.c.l.b16 %v539
        %v1092 = vunpack.c.h.b16 %v539
        %v1093 = vunpack.c.l.b16 %v540
        %v1094 = vunpack.c.h.b16 %v540
        %v1095 = vunpack.c.l.b16 %v541
        %v1096 = vunpack.c.h.b16 %v541
        %v1097 = vunpack.c.l.b16 %v542
        %v1098 = vunpack.c.h.b16 %v542
        %v1099 = vunpack.c.l.b16 %v543
        %v1100 = vunpack.c.h.b16 %v543
        %v1101 = vunpack.c.l.b16 %v544
        %v1102 = vunpack.c.h.b16 %v544
        %v1103 = vunpack.c.l.b16 %v545
        %v1104 = vunpack.c.h.b16 %v545
        %v1105 = vunpack.c.l.b16 %v546
        %v1106 = vunpack.c.h.b16 %v546
        %v1107 = vunpack.c.l.b16 %v547
        %v1108 = vunpack.c.h.b16 %v547
        %v1109 = vunpack.c.l.b16 %v548
        %v1110 = vunpack.c.h.b16 %v548
        %v1111 = vunpack.c.l.b16 %v549
        %v1112 = vunpack.c.h.b16 %v549
        %v1113 = vunpack.c.l.b16 %v550
        %v1114 = vunpack.c.h.b16 %v550
        %v1115 = vunpack.c.l.b16 %v551
        %v1116 = vunpack.c.h.b16 %v551
        %v1117 = vunpack.c.l.b16 %v552
        %v1118 = vunpack.c.h.b16 %v552
        %v1119 = vunpack.c.l.b16 %v553
        %v1120 = vunpack.c.h.b16 %v553
        %v1121 = vunpack.c.l.b16 %v554
        %v1122 = vunpack.c.h.b16 %v554
        %v1123 = vunpack.c.l.b16 %v555
        %v1124 = vunpack.c.h.b16 %v555
        %v1125 = vunpack.c.l.b16 %v556
        %v1126 = vunpack.c.h.b16 %v556
        %v1127 = vunpack.c.l.b16 %v557
        %v1128 = vunpack.c.h.b16 %v557
        %v1129 = vunpack.c.l.b16 %v558
        %v1130 = vunpack.c.h.b16 %v558
        %v1131 = vunpack.c.l.b16 %v559
        %v1132 = vunpack.c.h.b16 %v559
        %v1133 = vunpack.c.l.b16 %v560
        %v1134 = vunpack.c.h.b16 %v560
        %v1135 = vunpack.c.l.b16 %v561
        %v1136 = vunpack.c.h.b16 %v561
        %v1137 = vunpack.c.l.b16 %v562
        %v1138 = vunpack.c.h.b16 %v562
        %v1139 = vunpack.c.l.b16 %v563
        %v1140 = vunpack.c.h.b16 %v563
        %v1141 = vunpack.c.l.b16 %v564
        %v1142 = vunpack.c.h.b16 %v564
        %v1143 = vunpack.c.l.b16 %v565
        %v1144 = vunpack.c.h.b16 %v565
        %v1145 = vunpack.c.l.b16 %v566
        %v1146 = vunpack.c.h.b16 %v566
        %v1147 = vunpack.c.l.b16 %v567
        %v1148 = vunpack.c.h.b16 %v567
        %v1149 = vunpack.c.l.b16 %v568
        %v1150 = vunpack.c.h.b16 %v568
        %v1151 = vunpack.c.l.b16 %v569
        %v1152 = vunpack.c.h.b16 %v569
        %v1153 = vunpack.c.l.b16 %v570
        %v1154 = vunpack.c.h.b16 %v570
        %v1155 = vunpack.c.l.b16 %v571
        %v1156 = vunpack.c.h.b16 %v571
        %v1157 = vunpack.c.l.b16 %v572
        %v1158 = vunpack.c.h.b16 %v572
        %v1159 = vunpack.c.l.b16 %v573
        %v1160 = vunpack.c.h.b16 %v573
        %v1161 = vunpack.c.l.b16 %v574
        %v1162 = vunpack.c.h.b16 %v574
        %v1163 = vunpack.c.l.b16 %v575
        %v1164 = vunpack.c.h.b16 %v575
        %v1165 = vunpack.c.l.b16 %v576
        %v1166 = vunpack.c.h.b16 %v576
        %v1167 = vunpack.c.l.b16 %v577
        %v1168 = vunpack.c.h.b16 %v577
        %v1169 = vunpack.c.l.b16 %v578
        %v1170 = vunpack.c.h.b16 %v578
        %v1171 = vunpack.c.l.b16 %v579
        %v1172 = vunpack.c.h.b16 %v579
        %v1173 = vunpack.c.l.b16 %v580
        %v1174 = vunpack.c.h.b16 %v580
        %v1175 = vunpack.c.l.b16 %v581
        %v1176 = vunpack.c.h.b16 %v581
        %v1177 = vunpack.c.l.b16 %v582
        %v1178 = vunpack.c.h.b16 %v582
        %v1179 = vunpack.c.l.b16 %v583
        %v1180 = vunpack.c.h.b16 %v583
        %v1181 = vunpack.c.l.b16 %v584
        %v1182 = vunpack.c.h.b16 %v584
        %v1183 = vunpack.c.l.b16 %v585
        %v1184 = vunpack.c.h.b16 %v585
        %v1185 = vunpack.c.l.b16 %v586
        %v1186 = vunpack.c.h.b16 %v586
        %v1187 = vunpack.c.l.b16 %v587
        %v1188 = vunpack.c.h.b16 %v587
        %v1189 = vunpack.c.l.b16 %v588
        %v1190 = vunpack.c.h.b16 %v588
        %v1191 = vunpack.c.l.b16 %v589
        %v1192 = vunpack.c.h.b16 %v589
        %v1193 = vunpack.c.l.b16 %v590
        %v1194 = vunpack.c.h.b16 %v590
        %v1195 = vunpack.c.l.b16 %v591
        %v1196 = vunpack.c.h.b16 %v591
        %v1197 = vunpack.c.l.b16 %v592
        %v1198 = vunpack.c.h.b16 %v592
        %v1199 = vunpack.c.l.b16 %v593
        %v1200 = vunpack.c.h.b16 %v593
        %v1201 = vunpack.c.l.b16 %v594
        %v1202 = vunpack.c.h.b16 %v594
        %v1203 = vunpack.c.l.b16 %v595
        %v1204 = vunpack.c.h.b16 %v595
        %v1205 = vunpack.c.l.b16 %v596
        %v1206 = vunpack.c.h.b16 %v596
        %v1207 = vpack.c.b16 %v819, %v815
        %v1208 = vpack.c.b16 %v820, %v816
        %v1209 = vpack.c.b16 %v821, %v817
        %v1210 = vpack.c.b16 %v822, %v818
        %v1211 = vpack.c.b16 %v827, %v823
        %v1212 = vpack.c.b16 %v828, %v824
        %v1213 = vpack.c.b16 %v829, %v825
        %v1214 = vpack.c.b16 %v830, %v826
        %v1215 = vpack.c.b16 %v835, %v831
        %v1216 = vpack.c.b16 %v836, %v832
        %v1217 = vpack.c.b16 %v837, %v833
        %v1218 = vpack.c.b16 %v838, %v834
        %v1219 = vpack.c.b16 %v843, %v839
        %v1220 = vpack.c.b16 %v844, %v840
        %v1221 = vpack.c.b16 %v845, %v841
        %v1222 = vpack.c.b16 %v846, %v842
        %v1223 = vpack.c.b16 %v851, %v847
        %v1224 = vpack.c.b16 %v852, %v848
        %v1225 = vpack.c.b16 %v853, %v849
        %v1226 = vpack.c.b16 %v854, %v850
        %v1227 = vpack.c.b16 %v859, %v855
        %v1228 = vpack.c.b16 %v860, %v856
        %v1229 = vpack.c.b16 %v861, %v857
        %v1230 = vpack.c.b16 %v862, %v858
        %v1231 = vpack.c.b16 %v867, %v863
        %v1232 = vpack.c.b16 %v868, %v864
        %v1233 = vpack.c.b16 %v869, %v865
        %v1234 = vpack.c.b16 %v870, %v866
        %v1235 = vpack.c.b16 %v875, %v871
        %v1236 = vpack.c.b16 %v876, %v872
        %v1237 = vpack.c.b16 %v877, %v873
        %v1238 = vpack.c.b16 %v878, %v874
        %v1239 = vpack.c.b16 %v883, %v879
        %v1240 = vpack.c.b16 %v884, %v880
        %v1241 = vpack.c.b16 %v885, %v881
        %v1242 = vpack.c.b16 %v886, %v882
        %v1243 = vpack.c.b16 %v891, %v887
        %v1244 = vpack.c.b16 %v892, %v888
        %v1245 = vpack.c.b16 %v893, %v889
        %v1246 = vpack.c.b16 %v894, %v890
        %v1247 = vpack.c.b16 %v899, %v895
        %v1248 = vpack.c.b16 %v900, %v896
        %v1249 = vpack.c.b16 %v901, %v897
        %v1250 = vpack.c.b16 %v902, %v898
        %v1251 = vpack.c.b16 %v907, %v903
        %v1252 = vpack.c.b16 %v908, %v904
        %v1253 = vpack.c.b16 %v909, %v905
        %v1254 = vpack.c.b16 %v910, %v906
        %v1255 = vpack.c.b16 %v915, %v911
        %v1256 = vpack.c.b16 %v916, %v912
        %v1257 = vpack.c.b16 %v917, %v913
        %v1258 = vpack.c.b16 %v918, %v914
        %v1259 = vpack.c.b16 %v923, %v919
        %v1260 = vpack.c.b16 %v924, %v920
        %v1261 = vpack.c.b16 %v925, %v921
        %v1262 = vpack.c.b16 %v926, %v922
        %v1263 = vpack.c.b16 %v931, %v927
        %v1264 = vpack.c.b16 %v932, %v928
        %v1265 = vpack.c.b16 %v933, %v929
        %v1266 = vpack.c.b16 %v934, %v930
        %v1267 = vpack.c.b16 %v939, %v935
        %v1268 = vpack.c.b16 %v940, %v936
        %v1269 = vpack.c.b16 %v941, %v937
        %v1270 = vpack.c.b16 %v942, %v938
        %v1271 = vpack.c.b16 %v947, %v943
        %v1272 = vpack.c.b16 %v948, %v944
        %v1273 = vpack.c.b16 %v949, %v945
        %v1274 = vpack.c.b16 %v950, %v946
        %v1275 = vpack.c.b16 %v955, %v951
        %v1276 = vpack.c.b16 %v956, %v952
        %v1277 = vpack.c.b16 %v957, %v953
        %v1278 = vpack.c.b16 %v958, %v954
        %v1279 = vpack.c.b16 %v963, %v959
        %v1280 = vpack.c.b16 %v964, %v960
        %v1281 = vpack.c.b16 %v965, %v961
        %v1282 = vpack.c.b16 %v966, %v962
        %v1283 = vpack.c.b16 %v971, %v967
        %v1284 = vpack.c.b16 %v972, %v968
        %v1285 = vpack.c.b16 %v973, %v969
        %v1286 = vpack.c.b16 %v974, %v970
        %v1287 = vpack.c.b16 %v979, %v975
        %v1288 = vpack.c.b16 %v980, %v976
        %v1289 = vpack.c.b16 %v981, %v977
        %v1290 = vpack.c.b16 %v982, %v978
        %v1291 = vpack.c.b16 %v987, %v983
        %v1292 = vpack.c.b16 %v988, %v984
        %v1293 = vpack.c.b16 %v989, %v985
        %v1294 = vpack.c.b16 %v990, %v986
        %v1295 = vpack.c.b16 %v995, %v991
        %v1296 = vpack.c.b16 %v996, %v992
        %v1297 = vpack.c.b16 %v997, %v993
        %v1298 = vpack.c.b16 %v998, %v994
        %v1299 = vpack.c.b16 %v1003, %v999
        %v1300 = vpack.c.b16 %v1004, %v1000
        %v1301 = vpack.c.b16 %v1005, %v1001
        %v1302 = vpack.c.b16 %v1006, %v1002
        %v1303 = vpack.c.b16 %v1011, %v1007
        %v1304 = vpack.c.b16 %v1012, %v1008
        %v1305 = vpack.c.b16 %v1013, %v1009
        %v1306 = vpack.c.b16 %v1014, %v1010
        %v1307 = vpack.c.b16 %v1019, %v1015
        %v1308 = vpack.c.b16 %v1020, %v1016
        %v1309 = vpack.c.b16 %v1021, %v1017
        %v1310 = vpack.c.b16 %v1022, %v1018
        %v1311 = vpack.c.b16 %v1027, %v1023
        %v1312 = vpack.c.b16 %v1028, %v1024
        %v1313 = vpack.c.b16 %v1029, %v1025
        %v1314 = vpack.c.b16 %v1030, %v1026
        %v1315 = vpack.c.b16 %v1035, %v1031
        %v1316 = vpack.c.b16 %v1036, %v1032
        %v1317 = vpack.c.b16 %v1037, %v1033
        %v1318 = vpack.c.b16 %v1038, %v1034
        %v1319 = vpack.c.b16 %v1043, %v1039
        %v1320 = vpack.c.b16 %v1044, %v1040
        %v1321 = vpack.c.b16 %v1045, %v1041
        %v1322 = vpack.c.b16 %v1046, %v1042
        %v1323 = vpack.c.b16 %v1051, %v1047
        %v1324 = vpack.c.b16 %v1052, %v1048
        %v1325 = vpack.c.b16 %v1053, %v1049
        %v1326 = vpack.c.b16 %v1054, %v1050
        %v1327 = vpack.c.b16 %v1059, %v1055
        %v1328 = vpack.c.b16 %v1060, %v1056
        %v1329 = vpack.c.b16 %v1061, %v1057
        %v1330 = vpack.c.b16 %v1062, %v1058
        %v1331 = vpack.c.b16 %v1067, %v1063
        %v1332 = vpack.c.b16 %v1068, %v1064
        %v1333 = vpack.c.b16 %v1069, %v1065
        %v1334 = vpack.c.b16 %v1070, %v1066
        %v1335 = vpack.c.b16 %v1075, %v1071
        %v1336 = vpack.c.b16 %v1076, %v1072
        %v1337 = vpack.c.b16 %v1077, %v1073
        %v1338 = vpack.c.b16 %v1078, %v1074
        %v1339 = vpack.c.b16 %v1083, %v1079
        %v1340 = vpack.c.b16 %v1084, %v1080
        %v1341 = vpack.c.b16 %v1085, %v1081
        %v1342 = vpack.c.b16 %v1086, %v1082
        %v1343 = vpack.c.b16 %v1091, %v1087
        %v1344 = vpack.c.b16 %v1092, %v1088
        %v1345 = vpack.c.b16 %v1093, %v1089
        %v1346 = vpack.c.b16 %v1094, %v1090
        %v1347 = vpack.c.b16 %v1099, %v1095
        %v1348 = vpack.c.b16 %v1100, %v1096
        %v1349 = vpack.c.b16 %v1101, %v1097
        %v1350 = vpack.c.b16 %v1102, %v1098
        %v1351 = vpack.c.b16 %v1107, %v1103
        %v1352 = vpack.c.b16 %v1108, %v1104
        %v1353 = vpack.c.b16 %v1109, %v1105
        %v1354 = vpack.c.b16 %v1110, %v1106
        %v1355 = vpack.c.b16 %v1115, %v1111
        %v1356 = vpack.c.b16 %v1116, %v1112
        %v1357 = vpack.c.b16 %v1117, %v1113
        %v1358 = vpack.c.b16 %v1118, %v1114
        %v1359 = vpack.c.b16 %v1123, %v1119
        %v1360 = vpack.c.b16 %v1124, %v1120
        %v1361 = vpack.c.b16 %v1125, %v1121
        %v1362 = vpack.c.b16 %v1126, %v1122
        %v1363 = vpack.c.b16 %v1131, %v1127
        %v1364 = vpack.c.b16 %v1132, %v1128
        %v1365 = vpack.c.b16 %v1133, %v1129
        %v1366 = vpack.c.b16 %v1134, %v1130
        %v1367 = vpack.c.b16 %v1139, %v1135
        %v1368 = vpack.c.b16 %v1140, %v1136
        %v1369 = vpack.c.b16 %v1141, %v1137
        %v1370 = vpack.c.b16 %v1142, %v1138
        %v1371 = vpack.c.b16 %v1147, %v1143
        %v1372 = vpack.c.b16 %v1148, %v1144
        %v1373 = vpack.c.b16 %v1149, %v1145
        %v1374 = vpack.c.b16 %v1150, %v1146
        %v1375 = vpack.c.b16 %v1155, %v1151
        %v1376 = vpack.c.b16 %v1156, %v1152
        %v1377 = vpack.c.b16 %v1157, %v1153
        %v1378 = vpack.c.b16 %v1158, %v1154
        %v1379 = vpack.c.b16 %v1163, %v1159
        %v1380 = vpack.c.b16 %v1164, %v1160
        %v1381 = vpack.c.b16 %v1165, %v1161
        %v1382 = vpack.c.b16 %v1166, %v1162
        %v1383 = vpack.c.b16 %v1171, %v1167
        %v1384 = vpack.c.b16 %v1172, %v1168
        %v1385 = vpack.c.b16 %v1173, %v1169
        %v1386 = vpack.c.b16 %v1174, %v1170
        %v1387 = vpack.c.b16 %v1179, %v1175
        %v1388 = vpack.c.b16 %v1180, %v1176
        %v1389 = vpack.c.b16 %v1181, %v1177
        %v1390 = vpack.c.b16 %v1182, %v1178
        %v1391 = vpack.c.b16 %v1187, %v1183
        %v1392 = vpack.c.b16 %v1188, %v1184
        %v1393 = vpack.c.b16 %v1189, %v1185
        %v1394 = vpack.c.b16 %v1190, %v1186
        %v1395 = vpack.c.b16 %v1195, %v1191
        %v1396 = vpack.c.b16 %v1196, %v1192
        %v1397 = vpack.c.b16 %v1197, %v1193
        %v1398 = vpack.c.b16 %v1198, %v1194
        %v1399 = vpack.c.b16 %v1203, %v1199
        %v1400 = vpack.c.b16 %v1204, %v1200
        %v1401 = vpack.c.b16 %v1205, %v1201
        %v1402 = vpack.c.b16 %v1206, %v1202
        %vm1599 = vcmask 130048
        %v1601 = vsel %vm1599, %v393, 0
        %v1604 = vsel %vm1599, %v400, 0
        %1606 = vmatprep.subr.bf16.mxu0 %v1208
        %1607 = vmatpush1.bf16.msra.mxu0 %v1207
        %1608 = vmatprep.subr.bf16.mxu0 %v1212
        %1609 = vmatpush1.bf16.msra.mxu0 %v1211
        %1610 = vmatprep.subr.bf16.mxu0 %v1216
        %1611 = vmatpush1.bf16.msra.mxu0 %v1215
        %1612 = vmatprep.subr.bf16.mxu0 %v1220
        %1613 = vmatpush1.bf16.msra.mxu0 %v1219
        %1614 = vmatprep.subr.bf16.mxu0 %v1224
        %1615 = vmatpush1.bf16.msra.mxu0 %v1223
        %1616 = vmatprep.subr.bf16.mxu0 %v1228
        %1617 = vmatpush1.bf16.msra.mxu0 %v1227
        %1618 = vmatprep.subr.bf16.mxu0 %v1232
        %1619 = vmatpush1.bf16.msra.mxu0 %v1231
        %1620 = vmatprep.subr.bf16.mxu0 %v1236
        %1621 = vmatpush1.bf16.msra.mxu0 %v1235
        %1622 = vmatprep.subr.bf16.mxu0 %v1240
        %1623 = vmatpush1.bf16.msra.mxu0 %v1239
        %1624 = vmatprep.subr.bf16.mxu0 %v1244
        %1625 = vmatpush1.bf16.msra.mxu0 %v1243
        %1626 = vmatprep.subr.bf16.mxu0 %v1248
        %1627 = vmatpush1.bf16.msra.mxu0 %v1247
        %1628 = vmatprep.subr.bf16.mxu0 %v1252
        %1629 = vmatpush1.bf16.msra.mxu0 %v1251
        %1630 = vmatprep.subr.bf16.mxu0 %v1256
        %1631 = vmatpush1.bf16.msra.mxu0 %v1255
        %1632 = vmatprep.subr.bf16.mxu0 %v1260
        %1633 = vmatpush1.bf16.msra.mxu0 %v1259
        %1634 = vmatprep.subr.bf16.mxu0 %v1264
        %1635 = vmatpush1.bf16.msra.mxu0 %v1263
        %1636 = vmatprep.subr.bf16.mxu0 %v1268
        %1637 = vmatpush1.bf16.msra.mxu0 %v1267
        %1638 = vmatprep.mubr.bf16.mxu0 %v388
        %1639 = vmatmul.mubr.bf16.gmra.mrb[0].mxu0 %v387
        %v1640 = vpop.f32.mrb[0].mxu0
        %v1641 = vadd.f32 %v602, %v1640
        %v1642 = vpop.f32.mrb[0].mxu0
        %v1643 = vadd.f32 %v606, %v1642
        %v1644 = vpop.f32.mrb[0].mxu0
        %v1645 = vadd.f32 %v602, %v1644
        %v1646 = vpop.f32.mrb[0].mxu0
        %v1647 = vadd.f32 %v606, %v1646
        %1648 = vmatprep.mubr.bf16.mxu0 %v395
        %1649 = vmatmul.mubr.bf16.gmra.mrb[0].mxu0 %v394
        %v1650 = vpop.f32.mrb[0].mxu0
        %v1651 = vadd.f32 %v602, %v1650
        %v1652 = vpop.f32.mrb[0].mxu0
        %v1653 = vadd.f32 %v606, %v1652
        %v1654 = vpop.f32.mrb[0].mxu0
        %v1655 = vadd.f32 %v602, %v1654
        %v1656 = vpop.f32.mrb[0].mxu0
        %v1657 = vadd.f32 %v606, %v1656
        %1658 = vdwg.mxu0
        %1659 = vmatprep.subr.bf16.mxu0 %v1272
        %1660 = vmatpush1.bf16.msra.mxu0 %v1271
        %1661 = vmatprep.subr.bf16.mxu0 %v1276
        %1662 = vmatpush1.bf16.msra.mxu0 %v1275
        %1663 = vmatprep.subr.bf16.mxu0 %v1280
        %1664 = vmatpush1.bf16.msra.mxu0 %v1279
        %1665 = vmatprep.subr.bf16.mxu0 %v1284
        %1666 = vmatpush1.bf16.msra.mxu0 %v1283
        %1667 = vmatprep.subr.bf16.mxu0 %v1288
        %1668 = vmatpush1.bf16.msra.mxu0 %v1287
        %1669 = vmatprep.subr.bf16.mxu0 %v1292
        %1670 = vmatpush1.bf16.msra.mxu0 %v1291
        %1671 = vmatprep.subr.bf16.mxu0 %v1296
        %1672 = vmatpush1.bf16.msra.mxu0 %v1295
        %1673 = vmatprep.subr.bf16.mxu0 %v1300
        %1674 = vmatpush1.bf16.msra.mxu0 %v1299
        %1675 = vmatprep.subr.bf16.mxu0 %v1304
        %1676 = vmatpush1.bf16.msra.mxu0 %v1303
        %1677 = vmatprep.subr.bf16.mxu0 %v1308
        %1678 = vmatpush1.bf16.msra.mxu0 %v1307
        %1679 = vmatprep.subr.bf16.mxu0 %v1312
        %1680 = vmatpush1.bf16.msra.mxu0 %v1311
        %1681 = vmatprep.subr.bf16.mxu0 %v1316
        %1682 = vmatpush1.bf16.msra.mxu0 %v1315
        %1683 = vmatprep.subr.bf16.mxu0 %v1320
        %1684 = vmatpush1.bf16.msra.mxu0 %v1319
        %1685 = vmatprep.subr.bf16.mxu0 %v1324
        %1686 = vmatpush1.bf16.msra.mxu0 %v1323
        %1687 = vmatprep.subr.bf16.mxu0 %v1328
        %1688 = vmatpush1.bf16.msra.mxu0 %v1327
        %1689 = vmatprep.subr.bf16.mxu0 %v1332
        %1690 = vmatpush1.bf16.msra.mxu0 %v1331
        %1691 = vmatprep.mubr.bf16.mxu0 %v390
        %1692 = vmatmul.mubr.bf16.gmra.mrb[0].mxu0 %v389
        %v1693 = vpop.f32.mrb[0].mxu0
        %v1694 = vadd.f32 %v1641, %v1693
        %v1695 = vpop.f32.mrb[0].mxu0
        %v1696 = vadd.f32 %v1643, %v1695
        %v1697 = vpop.f32.mrb[0].mxu0
        %v1698 = vadd.f32 %v1645, %v1697
        %v1699 = vpop.f32.mrb[0].mxu0
        %v1700 = vadd.f32 %v1647, %v1699
        %1701 = vmatprep.mubr.bf16.mxu0 %v397
        %1702 = vmatmul.mubr.bf16.gmra.mrb[0].mxu0 %v396
        %v1703 = vpop.f32.mrb[0].mxu0
        %v1704 = vadd.f32 %v1651, %v1703
        %v1705 = vpop.f32.mrb[0].mxu0
        %v1706 = vadd.f32 %v1653, %v1705
        %v1707 = vpop.f32.mrb[0].mxu0
        %v1708 = vadd.f32 %v1655, %v1707
        %v1709 = vpop.f32.mrb[0].mxu0
        %v1710 = vadd.f32 %v1657, %v1709
        %1711 = vdwg.mxu0
        %1712 = vmatprep.subr.bf16.mxu0 %v1336
        %1713 = vmatpush1.bf16.msra.mxu0 %v1335
        %1714 = vmatprep.subr.bf16.mxu0 %v1340
        %1715 = vmatpush1.bf16.msra.mxu0 %v1339
        %1716 = vmatprep.subr.bf16.mxu0 %v1344
        %1717 = vmatpush1.bf16.msra.mxu0 %v1343
        %1718 = vmatprep.subr.bf16.mxu0 %v1348
        %1719 = vmatpush1.bf16.msra.mxu0 %v1347
        %1720 = vmatprep.subr.bf16.mxu0 %v1352
        %1721 = vmatpush1.bf16.msra.mxu0 %v1351
        %1722 = vmatprep.subr.bf16.mxu0 %v1356
        %1723 = vmatpush1.bf16.msra.mxu0 %v1355
        %1724 = vmatprep.subr.bf16.mxu0 %v1360
        %1725 = vmatpush1.bf16.msra.mxu0 %v1359
        %1726 = vmatprep.subr.bf16.mxu0 %v1364
        %1727 = vmatpush1.bf16.msra.mxu0 %v1363
        %1728 = vmatprep.subr.bf16.mxu0 %v1368
        %1729 = vmatpush1.bf16.msra.mxu0 %v1367
        %1730 = vmatprep.subr.bf16.mxu0 %v1372
        %1731 = vmatpush1.bf16.msra.mxu0 %v1371
        %1732 = vmatprep.subr.bf16.mxu0 %v1376
        %1733 = vmatpush1.bf16.msra.mxu0 %v1375
        %1734 = vmatprep.subr.bf16.mxu0 %v1380
        %1735 = vmatpush1.bf16.msra.mxu0 %v1379
        %1736 = vmatprep.subr.bf16.mxu0 %v1384
        %1737 = vmatpush1.bf16.msra.mxu0 %v1383
        %1738 = vmatprep.subr.bf16.mxu0 %v1388
        %1739 = vmatpush1.bf16.msra.mxu0 %v1387
        %1740 = vmatprep.subr.bf16.mxu0 %v1392
        %1741 = vmatpush1.bf16.msra.mxu0 %v1391
        %1742 = vmatprep.subr.bf16.mxu0 %v1396
        %1743 = vmatpush1.bf16.msra.mxu0 %v1395
        %1744 = vmatprep.mubr.bf16.mxu0 %v392
        %1745 = vmatmul.mubr.bf16.gmra.mrb[0].mxu0 %v391
        %v1746 = vpop.f32.mrb[0].mxu0
        %v1747 = vadd.f32 %v1694, %v1746
        %v1748 = vpop.f32.mrb[0].mxu0
        %v1749 = vadd.f32 %v1696, %v1748
        %v1750 = vpop.f32.mrb[0].mxu0
        %v1751 = vadd.f32 %v1698, %v1750
        %v1752 = vpop.f32.mrb[0].mxu0
        %v1753 = vadd.f32 %v1700, %v1752
        %1754 = vmatprep.mubr.bf16.mxu0 %v399
        %1755 = vmatmul.mubr.bf16.gmra.mrb[0].mxu0 %v398
        %v1756 = vpop.f32.mrb[0].mxu0
        %v1757 = vadd.f32 %v1704, %v1756
        %v1758 = vpop.f32.mrb[0].mxu0
        %v1759 = vadd.f32 %v1706, %v1758
        %v1760 = vpop.f32.mrb[0].mxu0
        %v1761 = vadd.f32 %v1708, %v1760
        %v1762 = vpop.f32.mrb[0].mxu0
        %v1763 = vadd.f32 %v1710, %v1762
        %1764 = vdwg.mxu0
        %1765 = vmatprep.subr.bf16.mxu0 %v1400
        %1766 = vmatpush1.bf16.msra.mxu0 %v1399
        %1767 = vmatprep.subr.bf16.mxu0 0
        %1768 = vmatpush1.bf16.msra.mxu0 0
        %1769 = vmatprep.subr.bf16.mxu0 0
        %1770 = vmatpush1.bf16.msra.mxu0 0
        %1771 = vmatprep.subr.bf16.mxu0 0
        %1772 = vmatpush1.bf16.msra.mxu0 0
        %1773 = vmatprep.subr.bf16.mxu0 0
        %1774 = vmatpush1.bf16.msra.mxu0 0
        %1775 = vmatprep.subr.bf16.mxu0 0
        %1776 = vmatpush1.bf16.msra.mxu0 0
        %1777 = vmatprep.subr.bf16.mxu0 0
        %1778 = vmatpush1.bf16.msra.mxu0 0
        %1779 = vmatprep.subr.bf16.mxu0 0
        %1780 = vmatpush1.bf16.msra.mxu0 0
        %1781 = vmatprep.subr.bf16.mxu0 0
        %1782 = vmatpush1.bf16.msra.mxu0 0
        %1783 = vmatprep.subr.bf16.mxu0 0
        %1784 = vmatpush1.bf16.msra.mxu0 0
        %1785 = vmatprep.subr.bf16.mxu0 0
        %1786 = vmatpush1.bf16.msra.mxu0 0
        %1787 = vmatprep.subr.bf16.mxu0 0
        %1788 = vmatpush1.bf16.msra.mxu0 0
        %1789 = vmatprep.subr.bf16.mxu0 0
        %1790 = vmatpush1.bf16.msra.mxu0 0
        %1791 = vmatprep.subr.bf16.mxu0 0
        %1792 = vmatpush1.bf16.msra.mxu0 0
        %1793 = vmatprep.subr.bf16.mxu0 0
        %1794 = vmatpush1.bf16.msra.mxu0 0
        %1795 = vmatprep.subr.bf16.mxu0 0
        %1796 = vmatpush1.bf16.msra.mxu0 0
        %1797 = vmatprep.mubr.bf16.mxu0 0
        %1798 = vmatmul.mubr.bf16.gmra.mrb[0].mxu0 %v1601
        %v1799 = vpop.f32.mrb[0].mxu0
        %v1800 = vadd.f32 %v1747, %v1799
        %v1801 = vpop.f32.mrb[0].mxu0
        %v1802 = vadd.f32 %v1749, %v1801
        %v1803 = vpop.f32.mrb[0].mxu0
        %v1804 = vadd.f32 %v1751, %v1803
        %v1805 = vpop.f32.mrb[0].mxu0
        %v1806 = vadd.f32 %v1753, %v1805
        %1807 = vmatprep.mubr.bf16.mxu0 0
        %1808 = vmatmul.mubr.bf16.gmra.mrb[0].mxu0 %v1604
        %v1809 = vpop.f32.mrb[0].mxu0
        %v1810 = vadd.f32 %v1757, %v1809
        %v1811 = vpop.f32.mrb[0].mxu0
        %v1812 = vadd.f32 %v1759, %v1811
        %v1813 = vpop.f32.mrb[0].mxu0
        %v1814 = vadd.f32 %v1761, %v1813
        %v1815 = vpop.f32.mrb[0].mxu0
        %v1816 = vadd.f32 %v1763, %v1815
        %1817 = vdwg.mxu0
        %1818 = vmatprep.subr.bf16.mxu0 %v1210
        %1819 = vmatpush1.bf16.msra.mxu0 %v1209
        %1820 = vmatprep.subr.bf16.mxu0 %v1214
        %1821 = vmatpush1.bf16.msra.mxu0 %v1213
        %1822 = vmatprep.subr.bf16.mxu0 %v1218
        %1823 = vmatpush1.bf16.msra.mxu0 %v1217
        %1824 = vmatprep.subr.bf16.mxu0 %v1222
        %1825 = vmatpush1.bf16.msra.mxu0 %v1221
        %1826 = vmatprep.subr.bf16.mxu0 %v1226
        %1827 = vmatpush1.bf16.msra.mxu0 %v1225
        %1828 = vmatprep.subr.bf16.mxu0 %v1230
        %1829 = vmatpush1.bf16.msra.mxu0 %v1229
        %1830 = vmatprep.subr.bf16.mxu0 %v1234
        %1831 = vmatpush1.bf16.msra.mxu0 %v1233
        %1832 = vmatprep.subr.bf16.mxu0 %v1238
        %1833 = vmatpush1.bf16.msra.mxu0 %v1237
        %1834 = vmatprep.subr.bf16.mxu0 %v1242
        %1835 = vmatpush1.bf16.msra.mxu0 %v1241
        %1836 = vmatprep.subr.bf16.mxu0 %v1246
        %1837 = vmatpush1.bf16.msra.mxu0 %v1245
        %1838 = vmatprep.subr.bf16.mxu0 %v1250
        %1839 = vmatpush1.bf16.msra.mxu0 %v1249
        %1840 = vmatprep.subr.bf16.mxu0 %v1254
        %1841 = vmatpush1.bf16.msra.mxu0 %v1253
        %1842 = vmatprep.subr.bf16.mxu0 %v1258
        %1843 = vmatpush1.bf16.msra.mxu0 %v1257
        %1844 = vmatprep.subr.bf16.mxu0 %v1262
        %1845 = vmatpush1.bf16.msra.mxu0 %v1261
        %1846 = vmatprep.subr.bf16.mxu0 %v1266
        %1847 = vmatpush1.bf16.msra.mxu0 %v1265
        %1848 = vmatprep.subr.bf16.mxu0 %v1270
        %1849 = vmatpush1.bf16.msra.mxu0 %v1269
        %1850 = vmatprep.mubr.bf16.mxu0 %v388
        %1851 = vmatmul.mubr.bf16.gmra.mrb[0].mxu0 %v387
        %v1852 = vpop.f32.mrb[0].mxu0
        %v1853 = vadd.f32 %v610, %v1852
        %v1854 = vpop.f32.mrb[0].mxu0
        %v1855 = vadd.f32 %v614, %v1854
        %v1856 = vpop.f32.mrb[0].mxu0
        %v1857 = vadd.f32 %v610, %v1856
        %v1858 = vpop.f32.mrb[0].mxu0
        %v1859 = vadd.f32 %v614, %v1858
        %1860 = vmatprep.mubr.bf16.mxu0 %v395
        %1861 = vmatmul.mubr.bf16.gmra.mrb[0].mxu0 %v394
        %v1862 = vpop.f32.mrb[0].mxu0
        %v1863 = vadd.f32 %v610, %v1862
        %v1864 = vpop.f32.mrb[0].mxu0
        %v1865 = vadd.f32 %v614, %v1864
        %v1866 = vpop.f32.mrb[0].mxu0
        %v1867 = vadd.f32 %v610, %v1866
        %v1868 = vpop.f32.mrb[0].mxu0
        %v1869 = vadd.f32 %v614, %v1868
        %1870 = vdwg.mxu0
        %1871 = vmatprep.subr.bf16.mxu0 %v1274
        %1872 = vmatpush1.bf16.msra.mxu0 %v1273
        %1873 = vmatprep.subr.bf16.mxu0 %v1278
        %1874 = vmatpush1.bf16.msra.mxu0 %v1277
        %1875 = vmatprep.subr.bf16.mxu0 %v1282
        %1876 = vmatpush1.bf16.msra.mxu0 %v1281
        %1877 = vmatprep.subr.bf16.mxu0 %v1286
        %1878 = vmatpush1.bf16.msra.mxu0 %v1285
        %1879 = vmatprep.subr.bf16.mxu0 %v1290
        %1880 = vmatpush1.bf16.msra.mxu0 %v1289
        %1881 = vmatprep.subr.bf16.mxu0 %v1294
        %1882 = vmatpush1.bf16.msra.mxu0 %v1293
        %1883 = vmatprep.subr.bf16.mxu0 %v1298
        %1884 = vmatpush1.bf16.msra.mxu0 %v1297
        %1885 = vmatprep.subr.bf16.mxu0 %v1302
        %1886 = vmatpush1.bf16.msra.mxu0 %v1301
        %1887 = vmatprep.subr.bf16.mxu0 %v1306
        %1888 = vmatpush1.bf16.msra.mxu0 %v1305
        %1889 = vmatprep.subr.bf16.mxu0 %v1310
        %1890 = vmatpush1.bf16.msra.mxu0 %v1309
        %1891 = vmatprep.subr.bf16.mxu0 %v1314
        %1892 = vmatpush1.bf16.msra.mxu0 %v1313
        %1893 = vmatprep.subr.bf16.mxu0 %v1318
        %1894 = vmatpush1.bf16.msra.mxu0 %v1317
        %1895 = vmatprep.subr.bf16.mxu0 %v1322
        %1896 = vmatpush1.bf16.msra.mxu0 %v1321
        %1897 = vmatprep.subr.bf16.mxu0 %v1326
        %1898 = vmatpush1.bf16.msra.mxu0 %v1325
        %1899 = vmatprep.subr.bf16.mxu0 %v1330
        %1900 = vmatpush1.bf16.msra.mxu0 %v1329
        %1901 = vmatprep.subr.bf16.mxu0 %v1334
        %1902 = vmatpush1.bf16.msra.mxu0 %v1333
        %1903 = vmatprep.mubr.bf16.mxu0 %v390
        %1904 = vmatmul.mubr.bf16.gmra.mrb[0].mxu0 %v389
        %v1905 = vpop.f32.mrb[0].mxu0
        %v1906 = vadd.f32 %v1853, %v1905
        %v1907 = vpop.f32.mrb[0].mxu0
        %v1908 = vadd.f32 %v1855, %v1907
        %v1909 = vpop.f32.mrb[0].mxu0
        %v1910 = vadd.f32 %v1857, %v1909
        %v1911 = vpop.f32.mrb[0].mxu0
        %v1912 = vadd.f32 %v1859, %v1911
        %1913 = vmatprep.mubr.bf16.mxu0 %v397
        %1914 = vmatmul.mubr.bf16.gmra.mrb[0].mxu0 %v396
        %v1915 = vpop.f32.mrb[0].mxu0
        %v1916 = vadd.f32 %v1863, %v1915
        %v1917 = vpop.f32.mrb[0].mxu0
        %v1918 = vadd.f32 %v1865, %v1917
        %v1919 = vpop.f32.mrb[0].mxu0
        %v1920 = vadd.f32 %v1867, %v1919
        %v1921 = vpop.f32.mrb[0].mxu0
        %v1922 = vadd.f32 %v1869, %v1921
        %1923 = vdwg.mxu0
        %1924 = vmatprep.subr.bf16.mxu0 %v1338
        %1925 = vmatpush1.bf16.msra.mxu0 %v1337
        %1926 = vmatprep.subr.bf16.mxu0 %v1342
        %1927 = vmatpush1.bf16.msra.mxu0 %v1341
        %1928 = vmatprep.subr.bf16.mxu0 %v1346
        %1929 = vmatpush1.bf16.msra.mxu0 %v1345
        %1930 = vmatprep.subr.bf16.mxu0 %v1350
        %1931 = vmatpush1.bf16.msra.mxu0 %v1349
        %1932 = vmatprep.subr.bf16.mxu0 %v1354
        %1933 = vmatpush1.bf16.msra.mxu0 %v1353
        %1934 = vmatprep.subr.bf16.mxu0 %v1358
        %1935 = vmatpush1.bf16.msra.mxu0 %v1357
        %1936 = vmatprep.subr.bf16.mxu0 %v1362
        %1937 = vmatpush1.bf16.msra.mxu0 %v1361
        %1938 = vmatprep.subr.bf16.mxu0 %v1366
        %1939 = vmatpush1.bf16.msra.mxu0 %v1365
        %1940 = vmatprep.subr.bf16.mxu0 %v1370
        %1941 = vmatpush1.bf16.msra.mxu0 %v1369
        %1942 = vmatprep.subr.bf16.mxu0 %v1374
        %1943 = vmatpush1.bf16.msra.mxu0 %v1373
        %1944 = vmatprep.subr.bf16.mxu0 %v1378
        %1945 = vmatpush1.bf16.msra.mxu0 %v1377
        %1946 = vmatprep.subr.bf16.mxu0 %v1382
        %1947 = vmatpush1.bf16.msra.mxu0 %v1381
        %1948 = vmatprep.subr.bf16.mxu0 %v1386
        %1949 = vmatpush1.bf16.msra.mxu0 %v1385
        %1950 = vmatprep.subr.bf16.mxu0 %v1390
        %1951 = vmatpush1.bf16.msra.mxu0 %v1389
        %1952 = vmatprep.subr.bf16.mxu0 %v1394
        %1953 = vmatpush1.bf16.msra.mxu0 %v1393
        %1954 = vmatprep.subr.bf16.mxu0 %v1398
        %1955 = vmatpush1.bf16.msra.mxu0 %v1397
        %1956 = vmatprep.mubr.bf16.mxu0 %v392
        %1957 = vmatmul.mubr.bf16.gmra.mrb[0].mxu0 %v391
        %v1958 = vpop.f32.mrb[0].mxu0
        %v1959 = vadd.f32 %v1906, %v1958
        %v1960 = vpop.f32.mrb[0].mxu0
        %v1961 = vadd.f32 %v1908, %v1960
        %v1962 = vpop.f32.mrb[0].mxu0
        %v1963 = vadd.f32 %v1910, %v1962
        %v1964 = vpop.f32.mrb[0].mxu0
        %v1965 = vadd.f32 %v1912, %v1964
        %1966 = vmatprep.mubr.bf16.mxu0 %v399
        %1967 = vmatmul.mubr.bf16.gmra.mrb[0].mxu0 %v398
        %v1968 = vpop.f32.mrb[0].mxu0
        %v1969 = vadd.f32 %v1916, %v1968
        %v1970 = vpop.f32.mrb[0].mxu0
        %v1971 = vadd.f32 %v1918, %v1970
        %v1972 = vpop.f32.mrb[0].mxu0
        %v1973 = vadd.f32 %v1920, %v1972
        %v1974 = vpop.f32.mrb[0].mxu0
        %v1975 = vadd.f32 %v1922, %v1974
        %1976 = vdwg.mxu0
        %1977 = vmatprep.subr.bf16.mxu0 %v1402
        %1978 = vmatpush1.bf16.msra.mxu0 %v1401
        %1979 = vmatprep.subr.bf16.mxu0 0
        %1980 = vmatpush1.bf16.msra.mxu0 0
        %1981 = vmatprep.subr.bf16.mxu0 0
        %1982 = vmatpush1.bf16.msra.mxu0 0
        %1983 = vmatprep.subr.bf16.mxu0 0
        %1984 = vmatpush1.bf16.msra.mxu0 0
        %1985 = vmatprep.subr.bf16.mxu0 0
        %1986 = vmatpush1.bf16.msra.mxu0 0
        %1987 = vmatprep.subr.bf16.mxu0 0
        %1988 = vmatpush1.bf16.msra.mxu0 0
        %1989 = vmatprep.subr.bf16.mxu0 0
        %1990 = vmatpush1.bf16.msra.mxu0 0
        %1991 = vmatprep.subr.bf16.mxu0 0
        %1992 = vmatpush1.bf16.msra.mxu0 0
        %1993 = vmatprep.subr.bf16.mxu0 0
        %1994 = vmatpush1.bf16.msra.mxu0 0
        %1995 = vmatprep.subr.bf16.mxu0 0
        %1996 = vmatpush1.bf16.msra.mxu0 0
        %1997 = vmatprep.subr.bf16.mxu0 0
        %1998 = vmatpush1.bf16.msra.mxu0 0
        %1999 = vmatprep.subr.bf16.mxu0 0
        %2000 = vmatpush1.bf16.msra.mxu0 0
        %2001 = vmatprep.subr.bf16.mxu0 0
        %2002 = vmatpush1.bf16.msra.mxu0 0
        %2003 = vmatprep.subr.bf16.mxu0 0
        %2004 = vmatpush1.bf16.msra.mxu0 0
        %2005 = vmatprep.subr.bf16.mxu0 0
        %2006 = vmatpush1.bf16.msra.mxu0 0
        %2007 = vmatprep.subr.bf16.mxu0 0
        %2008 = vmatpush1.bf16.msra.mxu0 0
        %2009 = vmatprep.mubr.bf16.mxu0 0
        %2010 = vmatmul.mubr.bf16.gmra.mrb[0].mxu0 %v1601
        %v2011 = vpop.f32.mrb[0].mxu0
        %v2012 = vadd.f32 %v1959, %v2011
        %v2013 = vpop.f32.mrb[0].mxu0
        %v2014 = vadd.f32 %v1961, %v2013
        %v2015 = vpop.f32.mrb[0].mxu0
        %v2016 = vadd.f32 %v1963, %v2015
        %v2017 = vpop.f32.mrb[0].mxu0
        %v2018 = vadd.f32 %v1965, %v2017
        %2019 = vmatprep.mubr.bf16.mxu0 0
        %2020 = vmatmul.mubr.bf16.gmra.mrb[0].mxu0 %v1604
        %v2021 = vpop.f32.mrb[0].mxu0
        %v2022 = vadd.f32 %v1969, %v2021
        %v2023 = vpop.f32.mrb[0].mxu0
        %v2024 = vadd.f32 %v1971, %v2023
        %v2025 = vpop.f32.mrb[0].mxu0
        %v2026 = vadd.f32 %v1973, %v2025
        %v2027 = vpop.f32.mrb[0].mxu0
        %v2028 = vadd.f32 %v1975, %v2027
        %2029 = vdwg.mxu0
        %v2030 = vmax.f32 %v1800, 0.0
        %v2031 = vmax.f32 %v1802, 0.0
        %v2032 = vmax.f32 %v2012, 0.0
        %v2033 = vmax.f32 %v2014, 0.0
        %v2034 = vmax.f32 %v1804, 0.0
        %v2035 = vmax.f32 %v1806, 0.0
        %v2036 = vmax.f32 %v2016, 0.0
        %v2037 = vmax.f32 %v2018, 0.0
        %v2038 = vmax.f32 %v1810, 0.0
        %v2039 = vmax.f32 %v1812, 0.0
        %v2040 = vmax.f32 %v2022, 0.0
        %v2041 = vmax.f32 %v2024, 0.0
        %v2042 = vmax.f32 %v1814, 0.0
        %v2043 = vmax.f32 %v1816, 0.0
        %v2044 = vmax.f32 %v2026, 0.0
        %v2045 = vmax.f32 %v2028, 0.0
        %v2046 = vpack.c.bf16 %v2034, %v2030
        %v2047 = vpack.c.bf16 %v2035, %v2031
        %v2048 = vpack.c.bf16 %v2036, %v2032
        %v2049 = vpack.c.bf16 %v2037, %v2033
        %v2050 = vpack.c.bf16 %v2042, %v2038
        %v2051 = vpack.c.bf16 %v2043, %v2039
        %v2052 = vpack.c.bf16 %v2044, %v2040
        %v2053 = vpack.c.bf16 %v2045, %v2041
        %v2054 = vld [vmem:[#allocation7] sm:$0xf]
        %v2055 = vld [vmem:[#allocation7 + $0x4] sm:$0xf]
        %v2056 = vld [vmem:[#allocation7 + $0x8] sm:$0xf]
        %v2057 = vld [vmem:[#allocation7 + $0xc] sm:$0xf]
        %v2058 = vld [vmem:[#allocation7 + $0x10] sm:$0xf]
        %v2059 = vld [vmem:[#allocation7 + $0x14] sm:$0xf]
        %v2060 = vld [vmem:[#allocation7 + $0x18] sm:$0xf]
        %v2061 = vld [vmem:[#allocation7 + $0x1c] sm:$0xf]
        %v2062 = vld [vmem:[#allocation7 + $0x20] sm:$0xf]
        %v2063 = vld [vmem:[#allocation7 + $0x24] sm:$0xf]
        %v2064 = vld [vmem:[#allocation7 + $0x28] sm:$0xf]
        %v2065 = vld [vmem:[#allocation7 + $0x2c] sm:$0xf]
        %v2066 = vld [vmem:[#allocation7 + $0x30] sm:$0xf]
        %v2067 = vld [vmem:[#allocation7 + $0x34] sm:$0xf]
        %v2068 = vld [vmem:[#allocation7 + $0x38] sm:$0xf]
        %v2069 = vld [vmem:[#allocation7 + $0x3c] sm:$0xf]
        %v2070 = vld [vmem:[#allocation7 + $0x40] sm:$0xf]
        %v2071 = vld [vmem:[#allocation7 + $0x44] sm:$0xf]
        %v2072 = vld [vmem:[#allocation7 + $0x48] sm:$0xf]
        %v2073 = vld [vmem:[#allocation7 + $0x4c] sm:$0xf]
        %v2074 = vld [vmem:[#allocation7 + $0x50] sm:$0xf]
        %v2075 = vld [vmem:[#allocation7 + $0x54] sm:$0xf]
        %v2076 = vld [vmem:[#allocation7 + $0x58] sm:$0xf]
        %v2077 = vld [vmem:[#allocation7 + $0x5c] sm:$0xf]
        %v2078 = vld [vmem:[#allocation7 + $0x60] sm:$0xf]
        %v2079 = vld [vmem:[#allocation7 + $0x64] sm:$0xf]
        %v2080 = vld [vmem:[#allocation7 + $0x68] sm:$0xf]
        %v2081 = vld [vmem:[#allocation7 + $0x6c] sm:$0xf]
        %v2082 = vld [vmem:[#allocation7 + $0x70] sm:$0xf]
        %v2083 = vld [vmem:[#allocation7 + $0x74] sm:$0xf]
        %v2084 = vld [vmem:[#allocation7 + $0x78] sm:$0xf]
        %v2085 = vld [vmem:[#allocation7 + $0x7c] sm:$0xf]
        %v2086 = vld [vmem:[#allocation7 + $0x80] sm:$0xf]
        %v2087 = vld [vmem:[#allocation7 + $0x84] sm:$0xf]
        %v2088 = vld [vmem:[#allocation7 + $0x88] sm:$0xf]
        %v2089 = vld [vmem:[#allocation7 + $0x8c] sm:$0xf]
        %v2090 = vld [vmem:[#allocation7 + $0x90] sm:$0xf]
        %v2091 = vld [vmem:[#allocation7 + $0x94] sm:$0xf]
        %v2092 = vld [vmem:[#allocation7 + $0x98] sm:$0xf]
        %v2093 = vld [vmem:[#allocation7 + $0x9c] sm:$0xf]
        %v2094 = vld [vmem:[#allocation7 + $0xa0] sm:$0xf]
        %v2095 = vld [vmem:[#allocation7 + $0xa4] sm:$0xf]
        %v2096 = vld [vmem:[#allocation7 + $0xa8] sm:$0xf]
        %v2097 = vld [vmem:[#allocation7 + $0xac] sm:$0xf]
        %v2098 = vld [vmem:[#allocation7 + $0xb0] sm:$0xf]
        %v2099 = vld [vmem:[#allocation7 + $0xb4] sm:$0xf]
        %v2100 = vld [vmem:[#allocation7 + $0xb8] sm:$0xf]
        %v2101 = vld [vmem:[#allocation7 + $0xbc] sm:$0xf]
        %v2102 = vld [vmem:[#allocation7 + $0xc0] sm:$0xf]
        %v2103 = vld [vmem:[#allocation7 + $0xc4] sm:$0xf]
        %v2104 = vld [vmem:[#allocation7 + $0xc8] sm:$0xf]
        %v2105 = vld [vmem:[#allocation7 + $0xcc] sm:$0xf]
        %v2106 = vld [vmem:[#allocation7 + $0xd0] sm:$0xf]
        %v2107 = vld [vmem:[#allocation7 + $0xd4] sm:$0xf]
        %v2108 = vld [vmem:[#allocation7 + $0xd8] sm:$0xf]
        %v2109 = vld [vmem:[#allocation7 + $0xdc] sm:$0xf]
        %v2110 = vld [vmem:[#allocation7 + $0xe0] sm:$0xf]
        %v2111 = vld [vmem:[#allocation7 + $0xe4] sm:$0xf]
        %v2112 = vld [vmem:[#allocation7 + $0xe8] sm:$0xf]
        %v2113 = vld [vmem:[#allocation7 + $0xec] sm:$0xf]
        %v2114 = vld [vmem:[#allocation7 + $0xf0] sm:$0xf]
        %v2115 = vld [vmem:[#allocation7 + $0xf4] sm:$0xf]
        %v2116 = vld [vmem:[#allocation7 + $0xf8] sm:$0xf]
        %v2117 = vld [vmem:[#allocation7 + $0xfc] sm:$0xf]
        %v2118 = vld [vmem:[%s4] sm:$0x1]
        %v2120 = vlaneseq
        %v2121 = vshrl.u32 %v2120, 7
        %v2122 = vsub.s32 0, %v2121
        %v2123 = vrot.slane %v2118, %v2122
        %v2189 = vunpack.c.l.b16 %v2054
        %v2190 = vunpack.c.l.b16 %v2055
        %v2191 = vunpack.c.l.b16 %v2056
        %v2192 = vunpack.c.l.b16 %v2057
        %v2193 = vunpack.c.l.b16 %v2058
        %v2194 = vunpack.c.l.b16 %v2059
        %v2195 = vunpack.c.l.b16 %v2060
        %v2196 = vunpack.c.l.b16 %v2061
        %v2197 = vunpack.c.l.b16 %v2062
        %v2198 = vunpack.c.l.b16 %v2063
        %v2199 = vunpack.c.l.b16 %v2064
        %v2200 = vunpack.c.l.b16 %v2065
        %v2201 = vunpack.c.l.b16 %v2066
        %v2202 = vunpack.c.l.b16 %v2067
        %v2203 = vunpack.c.l.b16 %v2068
        %v2204 = vunpack.c.l.b16 %v2069
        %v2205 = vunpack.c.l.b16 %v2070
        %v2206 = vunpack.c.l.b16 %v2071
        %v2207 = vunpack.c.l.b16 %v2072
        %v2208 = vunpack.c.l.b16 %v2073
        %v2209 = vunpack.c.l.b16 %v2074
        %v2210 = vunpack.c.l.b16 %v2075
        %v2211 = vunpack.c.l.b16 %v2076
        %v2212 = vunpack.c.l.b16 %v2077
        %v2213 = vunpack.c.l.b16 %v2078
        %v2214 = vunpack.c.l.b16 %v2079
        %v2215 = vunpack.c.l.b16 %v2080
        %v2216 = vunpack.c.l.b16 %v2081
        %v2217 = vunpack.c.l.b16 %v2082
        %v2218 = vunpack.c.l.b16 %v2083
        %v2219 = vunpack.c.l.b16 %v2084
        %v2220 = vunpack.c.l.b16 %v2085
        %v2221 = vunpack.c.l.b16 %v2086
        %v2222 = vunpack.c.l.b16 %v2087
        %v2223 = vunpack.c.l.b16 %v2088
        %v2224 = vunpack.c.l.b16 %v2089
        %v2225 = vunpack.c.l.b16 %v2090
        %v2226 = vunpack.c.l.b16 %v2091
        %v2227 = vunpack.c.l.b16 %v2092
        %v2228 = vunpack.c.l.b16 %v2093
        %v2229 = vunpack.c.l.b16 %v2094
        %v2230 = vunpack.c.l.b16 %v2095
        %v2231 = vunpack.c.l.b16 %v2096
        %v2232 = vunpack.c.l.b16 %v2097
        %v2233 = vunpack.c.l.b16 %v2098
        %v2234 = vunpack.c.l.b16 %v2099
        %v2235 = vunpack.c.l.b16 %v2100
        %v2236 = vunpack.c.l.b16 %v2101
        %v2237 = vunpack.c.l.b16 %v2102
        %v2238 = vunpack.c.l.b16 %v2103
        %v2239 = vunpack.c.l.b16 %v2104
        %v2240 = vunpack.c.l.b16 %v2105
        %v2241 = vunpack.c.l.b16 %v2106
        %v2242 = vunpack.c.l.b16 %v2107
        %v2243 = vunpack.c.l.b16 %v2108
        %v2244 = vunpack.c.l.b16 %v2109
        %v2245 = vunpack.c.l.b16 %v2110
        %v2246 = vunpack.c.l.b16 %v2111
        %v2247 = vunpack.c.l.b16 %v2112
        %v2248 = vunpack.c.l.b16 %v2113
        %v2249 = vunpack.c.l.b16 %v2114
        %v2250 = vunpack.c.l.b16 %v2115
        %v2251 = vunpack.c.l.b16 %v2116
        %v2252 = vunpack.c.l.b16 %v2117
        %v2253 = vpack.c.b16 %v2190, %v2189
        %v2254 = vpack.c.b16 %v2192, %v2191
        %v2255 = vpack.c.b16 %v2194, %v2193
        %v2256 = vpack.c.b16 %v2196, %v2195
        %v2257 = vpack.c.b16 %v2198, %v2197
        %v2258 = vpack.c.b16 %v2200, %v2199
        %v2259 = vpack.c.b16 %v2202, %v2201
        %v2260 = vpack.c.b16 %v2204, %v2203
        %v2261 = vpack.c.b16 %v2206, %v2205
        %v2262 = vpack.c.b16 %v2208, %v2207
        %v2263 = vpack.c.b16 %v2210, %v2209
        %v2264 = vpack.c.b16 %v2212, %v2211
        %v2265 = vpack.c.b16 %v2214, %v2213
        %v2266 = vpack.c.b16 %v2216, %v2215
        %v2267 = vpack.c.b16 %v2218, %v2217
        %v2268 = vpack.c.b16 %v2220, %v2219
        %v2269 = vpack.c.b16 %v2222, %v2221
        %v2270 = vpack.c.b16 %v2224, %v2223
        %v2271 = vpack.c.b16 %v2226, %v2225
        %v2272 = vpack.c.b16 %v2228, %v2227
        %v2273 = vpack.c.b16 %v2230, %v2229
        %v2274 = vpack.c.b16 %v2232, %v2231
        %v2275 = vpack.c.b16 %v2234, %v2233
        %v2276 = vpack.c.b16 %v2236, %v2235
        %v2277 = vpack.c.b16 %v2238, %v2237
        %v2278 = vpack.c.b16 %v2240, %v2239
        %v2279 = vpack.c.b16 %v2242, %v2241
        %v2280 = vpack.c.b16 %v2244, %v2243
        %v2281 = vpack.c.b16 %v2246, %v2245
        %v2282 = vpack.c.b16 %v2248, %v2247
        %v2283 = vpack.c.b16 %v2250, %v2249
        %v2284 = vpack.c.b16 %v2252, %v2251
        %2317 = vmatprep.subr.bf16.mxu0 0
        %2318 = vmatpush1.bf16.msra.mxu0 %v2253
        %2319 = vmatprep.subr.bf16.mxu0 0
        %2320 = vmatpush1.bf16.msra.mxu0 %v2254
        %2321 = vmatprep.subr.bf16.mxu0 0
        %2322 = vmatpush1.bf16.msra.mxu0 %v2255
        %2323 = vmatprep.subr.bf16.mxu0 0
        %2324 = vmatpush1.bf16.msra.mxu0 %v2256
        %2325 = vmatprep.subr.bf16.mxu0 0
        %2326 = vmatpush1.bf16.msra.mxu0 %v2257
        %2327 = vmatprep.subr.bf16.mxu0 0
        %2328 = vmatpush1.bf16.msra.mxu0 %v2258
        %2329 = vmatprep.subr.bf16.mxu0 0
        %2330 = vmatpush1.bf16.msra.mxu0 %v2259
        %2331 = vmatprep.subr.bf16.mxu0 0
        %2332 = vmatpush1.bf16.msra.mxu0 %v2260
        %2333 = vmatprep.subr.bf16.mxu0 0
        %2334 = vmatpush1.bf16.msra.mxu0 %v2261
        %2335 = vmatprep.subr.bf16.mxu0 0
        %2336 = vmatpush1.bf16.msra.mxu0 %v2262
        %2337 = vmatprep.subr.bf16.mxu0 0
        %2338 = vmatpush1.bf16.msra.mxu0 %v2263
        %2339 = vmatprep.subr.bf16.mxu0 0
        %2340 = vmatpush1.bf16.msra.mxu0 %v2264
        %2341 = vmatprep.subr.bf16.mxu0 0
        %2342 = vmatpush1.bf16.msra.mxu0 %v2265
        %2343 = vmatprep.subr.bf16.mxu0 0
        %2344 = vmatpush1.bf16.msra.mxu0 %v2266
        %2345 = vmatprep.subr.bf16.mxu0 0
        %2346 = vmatpush1.bf16.msra.mxu0 %v2267
        %2347 = vmatprep.subr.bf16.mxu0 0
        %2348 = vmatpush1.bf16.msra.mxu0 %v2268
        %2349 = vmatprep.mubr.bf16.mxu0 %v2047
        %2350 = vmatmul.mubr.bf16.gmra.mrb[0].mxu0 %v2046
        %v2351 = vpop.f32.mrb[0].mxu0
        %v2352 = vadd.f32 %v2123, %v2351
        %v2353 = vpop.f32.mrb[0].mxu0
        %v2354 = vpop.f32.mrb[0].mxu0
        %v2355 = vadd.f32 %v2123, %v2354
        %v2356 = vpop.f32.mrb[0].mxu0
        %2357 = vmatprep.mubr.bf16.mxu0 %v2051
        %2358 = vmatmul.mubr.bf16.gmra.mrb[0].mxu0 %v2050
        %v2359 = vpop.f32.mrb[0].mxu0
        %v2360 = vadd.f32 %v2123, %v2359
        %v2361 = vpop.f32.mrb[0].mxu0
        %v2362 = vpop.f32.mrb[0].mxu0
        %v2363 = vadd.f32 %v2123, %v2362
        %v2364 = vpop.f32.mrb[0].mxu0
        %2365 = vdwg.mxu0
        %2366 = vmatprep.subr.bf16.mxu0 0
        %2367 = vmatpush1.bf16.msra.mxu0 %v2269
        %2368 = vmatprep.subr.bf16.mxu0 0
        %2369 = vmatpush1.bf16.msra.mxu0 %v2270
        %2370 = vmatprep.subr.bf16.mxu0 0
        %2371 = vmatpush1.bf16.msra.mxu0 %v2271
        %2372 = vmatprep.subr.bf16.mxu0 0
        %2373 = vmatpush1.bf16.msra.mxu0 %v2272
        %2374 = vmatprep.subr.bf16.mxu0 0
        %2375 = vmatpush1.bf16.msra.mxu0 %v2273
        %2376 = vmatprep.subr.bf16.mxu0 0
        %2377 = vmatpush1.bf16.msra.mxu0 %v2274
        %2378 = vmatprep.subr.bf16.mxu0 0
        %2379 = vmatpush1.bf16.msra.mxu0 %v2275
        %2380 = vmatprep.subr.bf16.mxu0 0
        %2381 = vmatpush1.bf16.msra.mxu0 %v2276
        %2382 = vmatprep.subr.bf16.mxu0 0
        %2383 = vmatpush1.bf16.msra.mxu0 %v2277
        %2384 = vmatprep.subr.bf16.mxu0 0
        %2385 = vmatpush1.bf16.msra.mxu0 %v2278
        %2386 = vmatprep.subr.bf16.mxu0 0
        %2387 = vmatpush1.bf16.msra.mxu0 %v2279
        %2388 = vmatprep.subr.bf16.mxu0 0
        %2389 = vmatpush1.bf16.msra.mxu0 %v2280
        %2390 = vmatprep.subr.bf16.mxu0 0
        %2391 = vmatpush1.bf16.msra.mxu0 %v2281
        %2392 = vmatprep.subr.bf16.mxu0 0
        %2393 = vmatpush1.bf16.msra.mxu0 %v2282
        %2394 = vmatprep.subr.bf16.mxu0 0
        %2395 = vmatpush1.bf16.msra.mxu0 %v2283
        %2396 = vmatprep.subr.bf16.mxu0 0
        %2397 = vmatpush1.bf16.msra.mxu0 %v2284
        %2398 = vmatprep.mubr.bf16.mxu0 %v2049
        %2399 = vmatmul.mubr.bf16.gmra.mrb[0].mxu0 %v2048
        %v2400 = vpop.f32.mrb[0].mxu0
        %v2401 = vadd.f32 %v2352, %v2400
        %v2402 = vpop.f32.mrb[0].mxu0
        %v2403 = vpop.f32.mrb[0].mxu0
        %v2404 = vadd.f32 %v2355, %v2403
        %v2405 = vpop.f32.mrb[0].mxu0
        %2406 = vmatprep.mubr.bf16.mxu0 %v2053
        %2407 = vmatmul.mubr.bf16.gmra.mrb[0].mxu0 %v2052
        %v2408 = vpop.f32.mrb[0].mxu0
        %v2409 = vadd.f32 %v2360, %v2408
        %v2410 = vpop.f32.mrb[0].mxu0
        %v2411 = vpop.f32.mrb[0].mxu0
        %v2412 = vadd.f32 %v2363, %v2411
        %v2413 = vpop.f32.mrb[0].mxu0
        %2414 = vdwg.mxu0
        %v2415 = vmax.f32 %v2401, 0.0
        %v2416 = vmax.f32 %v2404, 0.0
        %v2417 = vmax.f32 %v2409, 0.0
        %v2418 = vmax.f32 %v2412, 0.0
        %v2419 = vpack.c.bf16 %v2416, %v2415
        %v2420 = vpack.c.bf16 %v2418, %v2417
        %v2421 = vld [vmem:[#allocation9] sm:$0xf]
        %v2422 = vld [vmem:[#allocation9 + $0x4] sm:$0xf]
        %v2423 = vld [vmem:[#allocation9 + $0x8] sm:$0xf]
        %v2424 = vld [vmem:[#allocation9 + $0xc] sm:$0xf]
        %v2425 = vld [vmem:[#allocation9 + $0x10] sm:$0xf]
        %v2426 = vld [vmem:[#allocation9 + $0x14] sm:$0xf]
        %v2427 = vld [vmem:[#allocation9 + $0x18] sm:$0xf]
        %v2428 = vld [vmem:[#allocation9 + $0x1c] sm:$0xf]
        %v2429 = vld [vmem:[#allocation9 + $0x20] sm:$0xf]
        %v2430 = vld [vmem:[#allocation9 + $0x24] sm:$0xf]
        %v2431 = vld [vmem:[#allocation9 + $0x28] sm:$0xf]
        %v2432 = vld [vmem:[#allocation9 + $0x2c] sm:$0xf]
        %v2433 = vld [vmem:[#allocation9 + $0x30] sm:$0xf]
        %v2434 = vld [vmem:[#allocation9 + $0x34] sm:$0xf]
        %v2435 = vld [vmem:[#allocation9 + $0x38] sm:$0xf]
        %v2436 = vld [vmem:[#allocation9 + $0x3c] sm:$0xf]
        %v2437 = vld [vmem:[%s6] sm:$0x1]
        %v2439 = vlaneseq
        %v2440 = vshrl.u32 %v2439, 7
        %v2441 = vsub.s32 0, %v2440
        %v2442 = vrot.slane %v2437, %v2441
        %v2460 = vunpack.c.l.b16 %v2421
        %v2461 = vunpack.c.l.b16 %v2422
        %v2462 = vunpack.c.l.b16 %v2423
        %v2463 = vunpack.c.l.b16 %v2424
        %v2464 = vunpack.c.l.b16 %v2425
        %v2465 = vunpack.c.l.b16 %v2426
        %v2466 = vunpack.c.l.b16 %v2427
        %v2467 = vunpack.c.l.b16 %v2428
        %v2468 = vunpack.c.l.b16 %v2429
        %v2469 = vunpack.c.l.b16 %v2430
        %v2470 = vunpack.c.l.b16 %v2431
        %v2471 = vunpack.c.l.b16 %v2432
        %v2472 = vunpack.c.l.b16 %v2433
        %v2473 = vunpack.c.l.b16 %v2434
        %v2474 = vunpack.c.l.b16 %v2435
        %v2475 = vunpack.c.l.b16 %v2436
        %v2476 = vpack.c.b16 %v2461, %v2460
        %v2477 = vpack.c.b16 %v2463, %v2462
        %v2478 = vpack.c.b16 %v2465, %v2464
        %v2479 = vpack.c.b16 %v2467, %v2466
        %v2480 = vpack.c.b16 %v2469, %v2468
        %v2481 = vpack.c.b16 %v2471, %v2470
        %v2482 = vpack.c.b16 %v2473, %v2472
        %v2483 = vpack.c.b16 %v2475, %v2474
        %2492 = vmatprep.subr.bf16.mxu0 0
        %2493 = vmatpush1.bf16.msra.mxu0 %v2476
        %2494 = vmatprep.subr.bf16.mxu0 0
        %2495 = vmatpush1.bf16.msra.mxu0 %v2477
        %2496 = vmatprep.subr.bf16.mxu0 0
        %2497 = vmatpush1.bf16.msra.mxu0 %v2478
        %2498 = vmatprep.subr.bf16.mxu0 0
        %2499 = vmatpush1.bf16.msra.mxu0 %v2479
        %2500 = vmatprep.subr.bf16.mxu0 0
        %2501 = vmatpush1.bf16.msra.mxu0 %v2480
        %2502 = vmatprep.subr.bf16.mxu0 0
        %2503 = vmatpush1.bf16.msra.mxu0 %v2481
        %2504 = vmatprep.subr.bf16.mxu0 0
        %2505 = vmatpush1.bf16.msra.mxu0 %v2482
        %2506 = vmatprep.subr.bf16.mxu0 0
        %2507 = vmatpush1.bf16.msra.mxu0 %v2483
        %2508 = vmatprep.subr.bf16.mxu0 0
        %2509 = vmatpush1.bf16.msra.mxu0 0
        %2510 = vmatprep.subr.bf16.mxu0 0
        %2511 = vmatpush1.bf16.msra.mxu0 0
        %2512 = vmatprep.subr.bf16.mxu0 0
        %2513 = vmatpush1.bf16.msra.mxu0 0
        %2514 = vmatprep.subr.bf16.mxu0 0
        %2515 = vmatpush1.bf16.msra.mxu0 0
        %2516 = vmatprep.subr.bf16.mxu0 0
        %2517 = vmatpush1.bf16.msra.mxu0 0
        %2518 = vmatprep.subr.bf16.mxu0 0
        %2519 = vmatpush1.bf16.msra.mxu0 0
        %2520 = vmatprep.subr.bf16.mxu0 0
        %2521 = vmatpush1.bf16.msra.mxu0 0
        %2522 = vmatprep.subr.bf16.mxu0 0
        %2523 = vmatpush1.bf16.msra.mxu0 0
        %2524 = vmatprep.mubr.bf16.mxu0 0
        %2525 = vmatmul.mubr.bf16.gmra.mrb[0].mxu0 %v2419
        %v2526 = vpop.f32.mrb[0].mxu0
        %v2527 = vadd.f32 %v2442, %v2526
        %v2528 = vpop.f32.mrb[0].mxu0
        %v2529 = vpop.f32.mrb[0].mxu0
        %v2530 = vadd.f32 %v2442, %v2529
        %v2531 = vpop.f32.mrb[0].mxu0
        %2532 = vmatprep.mubr.bf16.mxu0 0
        %2533 = vmatmul.mubr.bf16.gmra.mrb[0].mxu0 %v2420
        %v2534 = vpop.f32.mrb[0].mxu0
        %v2535 = vadd.f32 %v2442, %v2534
        %v2536 = vpop.f32.mrb[0].mxu0
        %v2537 = vpop.f32.mrb[0].mxu0
        %v2538 = vadd.f32 %v2442, %v2537
        %v2539 = vpop.f32.mrb[0].mxu0
        %2540 = vdwg.mxu0
        %2541 = vst [vmem:[%s356] sm:$0xff] %v2527
        %2542 = vst [vmem:[%s356 + $0x8] sm:$0xff] %v2530
        %2543 = vst [vmem:[%s356 + $0x10] sm:$0xff] %v2535
        %2544 = vst [vmem:[%s356 + $0x18] sm:$0xff] %v2538
        %s2545 = smul.u32 4, %s23
        %p2546 = scmp.lt.s32.totalorder %s2545, 7
        %s2547 = scalar_select %p2546, %s2545, 7
        %s2548 = smul.addr %s2547, 8
        %s2549 = scalar_lea.vmem %s7, %s2548
        // Predicated region
        $region69: #{mnist_net_forward.1} parent=47 // pred_check
          %p2550 = pneg %p193
        $region70: #{mnist_net_forward.1} parent=47 // pred_check_branch
          %2552 = sbr.rel (%p2550) target = $region72
        $region71: #{mnist_net_forward.1} parent=47 // pred_region
          %s2553 = smul.u32 4, %s23
        $region72: #{mnist_net_forward.1} parent=47 // pred_fallthru
          _
      $region48: #{mnist_net_forward.1} parent=5 // pred_fallthru
        _
      %p2554 = scmp.le.s32.totalorder 2, %s18
      // Predicated region
      $region73: #{mnist_net_forward.1} parent=5 // pred_check
        %p2555 = pneg %p2554
      $region74: #{mnist_net_forward.1} parent=5 // pred_check_branch
        %2557 = sbr.rel (%p2555) target = $region76
      $region75: #{mnist_net_forward.1} parent=5 // pred_region
        %s2558 = ssub.s32 %s18, 2
        // Predicated region
        $region77: #{mnist_net_forward.1} parent=75 // pred_check
          %p2559 = pneg %p199
        $region78: #{mnist_net_forward.1} parent=75 // pred_check_branch
          %2561 = sbr.rel (%p2559) target = $region80
        $region79: #{mnist_net_forward.1} parent=75 // pred_region
          %s2562 = smul.u32 4, %s24
          %p2563 = scmp.lt.s32.totalorder %s2562, 7
          %s2564 = scalar_select %p2563, %s2562, 7
          %s2565 = smul.addr %s2564, 8
          %s2566 = scalar_lea.vmem %s7, %s2565
        $region80: #{mnist_net_forward.1} parent=75 // pred_fallthru
          _
      $region76: #{mnist_net_forward.1} parent=5 // pred_fallthru
        _
    $region6: #{mnist_net_forward.1} parent=1 // loop_footer
      %s22 = sadd.s32 1, %s18
    $region7: #{mnist_net_forward.1} parent=1 // loop_footer_branch
      %17 = sbr.rel target = $region3
    $region8: #{mnist_net_forward.1} parent=1 // loop_exit
      _
    %2567 = vsyncpa [#allocation3], 1
    %s2568 = scalar_lea.sflag [#allocation3], 1
    %2569 = vsyncpa %s2568, 1
    %2570 = vsyncpa [#allocation5], 1
    %2571 = vsyncpa [#allocation8], 1

</llo_original>
